<compile_context>
chip_gen: v7x
topology: tpu7x:2x2x1
jax: 0.10.0
libtpu: 0.0.40
codegen_flags: <defaults>
</compile_context>

<pallas_src>
import functools

import jax
import jax.numpy as jnp
from jax.experimental import pallas as pl
from jax.experimental.pallas import tpu as pltpu


# ---------------------------------------------------------------------------
# Fused Pallas kernel: whole VAE forward in one call
# ---------------------------------------------------------------------------

def _fused_vae_kernel(*refs, n_enc, n_dec):
    """refs layout (all VMEM):
        inputs : x, eps,
                 (enc_w, enc_b) * n_enc,
                 wm, bm, wv, bv,                 # z_mean / z_log_var
                 (dec_w, dec_b) * n_dec,
                 dec_out_w, dec_out_b
        outputs: x_hat, mean, logvar
    """
    idx = 0
    x_ref = refs[idx]; idx += 1
    eps_ref = refs[idx]; idx += 1
    enc = []
    for _ in range(n_enc):
        enc.append((refs[idx], refs[idx + 1])); idx += 2
    wm_ref, bm_ref = refs[idx], refs[idx + 1]; idx += 2
    wv_ref, bv_ref = refs[idx], refs[idx + 1]; idx += 2
    dec = []
    for _ in range(n_dec):
        dec.append((refs[idx], refs[idx + 1])); idx += 2
    dow_ref, dob_ref = refs[idx], refs[idx + 1]; idx += 2
    xhat_ref, mean_ref, logvar_ref = refs[idx], refs[idx + 1], refs[idx + 2]

    # ---- Encoder: Linear + ReLU chain (all activations stay on-chip) ----
    h = x_ref[...]
    for (w_ref, b_ref) in enc:
        h = jnp.dot(h, w_ref[...], preferred_element_type=jnp.float32) + b_ref[...]
        h = jnp.maximum(h, 0.0)

    # ---- Latent heads ----
    mean = jnp.dot(h, wm_ref[...], preferred_element_type=jnp.float32) + bm_ref[...]
    logvar = jnp.dot(h, wv_ref[...], preferred_element_type=jnp.float32) + bv_ref[...]

    # ---- Reparameterization trick (exactly as in the reference module):
    #      sigma = 0.5 * exp(logvar);  z = mean + eps * sigma
    sigma = 0.5 * jnp.exp(logvar)
    z = mean + eps_ref[...] * sigma

    # ---- Decoder: Linear + ReLU chain, final Linear + Sigmoid ----
    d = z
    for (w_ref, b_ref) in dec:
        d = jnp.dot(d, w_ref[...], preferred_element_type=jnp.float32) + b_ref[...]
        d = jnp.maximum(d, 0.0)
    d = jnp.dot(d, dow_ref[...], preferred_element_type=jnp.float32) + dob_ref[...]
    d = jax.nn.sigmoid(d)

    xhat_ref[...] = d.astype(xhat_ref.dtype)
    mean_ref[...] = mean.astype(mean_ref.dtype)
    logvar_ref[...] = logvar.astype(logvar_ref.dtype)


# ---------------------------------------------------------------------------
# Parameter initialization (deterministic, synthetic)
# ---------------------------------------------------------------------------

def _init_linear(key, in_dim, out_dim, scale=0.05):
    kw, kb = jax.random.split(key)
    # weights stored as (in, out) so the kernel computes x @ W + b
    w = scale * jax.random.normal(kw, (in_dim, out_dim), dtype=jnp.float32)
    b = scale * jax.random.normal(kb, (1, out_dim), dtype=jnp.float32)
    return w, b


def init_mlp_vae_params(key, shape, encoder_dims, decoder_dims, latent_dim,
                        n_classes=10):
    assert latent_dim % 2 == 0, "Latent dimension must be even"
    flat = int(shape[0] * shape[1] * shape[2])
    params = {"encoder": [], "decoder": []}
    keys = jax.random.split(key, len(encoder_dims) + len(decoder_dims) + 5)
    ki = 0

    # Encoder MLP: flat -> encoder_dims[0] -> ... -> encoder_dims[-1] (ReLU each)
    prev = flat
    for d in encoder_dims:
        params["encoder"].append(_init_linear(keys[ki], prev, d)); ki += 1
        prev = d
    params["z_mean"] = _init_linear(keys[ki], prev, latent_dim); ki += 1
    params["z_log_var"] = _init_linear(keys[ki], prev, latent_dim); ki += 1

    # Classification head exists in the module but is unused in forward().
    params["classification"] = _init_linear(keys[ki], encoder_dims[-1],
                                            n_classes); ki += 1

    # Decoder MLP: latent -> decoder_dims[0] -> ... -> flat (Sigmoid at end)
    prev = latent_dim
    for d in decoder_dims:
        params["decoder"].append(_init_linear(keys[ki], prev, d)); ki += 1
        prev = d
    params["decoder_out"] = _init_linear(keys[ki], prev, flat); ki += 1
    return params


# ---------------------------------------------------------------------------
# Forward pass (single fused pallas_call)
# ---------------------------------------------------------------------------

def mlp_vae_forward(params, x_nchw, eps, shape, *, block_m=128):
    """Replicates MlpVAE.forward: returns (x_hat, mean, logvar)."""
    B = x_nchw.shape[0]
    flat = int(shape[0] * shape[1] * shape[2])
    x = x_nchw.reshape(B, -1).astype(jnp.float32)  # Flatten()
    eps = eps.astype(jnp.float32)

    enc = params["encoder"]
    dec = params["decoder"]
    wm, bm = params["z_mean"]
    wv, bv = params["z_log_var"]
    dow, dob = params["decoder_out"]
    latent_dim = wm.shape[1]

    # Batch tiling: at small B the whole batch is one block (grid=(1,)); for
    # large B this pipelines activation DMA and shards over v7x's 2 TCs.
    tm = B if B <= block_m else block_m
    grid = (pl.cdiv(B, tm),)

    def batch_spec(n):
        return pl.BlockSpec((tm, n), lambda i: (i, 0))

    def full_spec(shp):
        return pl.BlockSpec(shp, lambda i: (0, 0))

    in_arrays = [x, eps]
    in_specs = [batch_spec(flat), batch_spec(latent_dim)]
    for (w, b) in enc:
        in_arrays += [w, b]
        in_specs += [full_spec(w.shape), full_spec(b.shape)]
    in_arrays += [wm, bm, wv, bv]
    in_specs += [full_spec(wm.shape), full_spec(bm.shape),
                 full_spec(wv.shape), full_spec(bv.shape)]
    for (w, b) in dec:
        in_arrays += [w, b]
        in_specs += [full_spec(w.shape), full_spec(b.shape)]
    in_arrays += [dow, dob]
    in_specs += [full_spec(dow.shape), full_spec(dob.shape)]

    out_shape = (
        jax.ShapeDtypeStruct((B, flat), jnp.float32),
        jax.ShapeDtypeStruct((B, latent_dim), jnp.float32),
        jax.ShapeDtypeStruct((B, latent_dim), jnp.float32),
    )
    out_specs = (batch_spec(flat), batch_spec(latent_dim), batch_spec(latent_dim))

    kernel = functools.partial(_fused_vae_kernel, n_enc=len(enc), n_dec=len(dec))

    x_hat_flat, mean, logvar = pl.pallas_call(
        kernel,
        out_shape=out_shape,
        grid=grid,
        in_specs=in_specs,
        out_specs=out_specs,
        compiler_params=pltpu.CompilerParams(
            dimension_semantics=("parallel",)),
    )(*in_arrays)

    x_hat = x_hat_flat.reshape(-1, *shape)  # .view(-1, *self.shape) -> NCHW
    return x_hat, mean, logvar


# ---------------------------------------------------------------------------
# Main
# ---------------------------------------------------------------------------

if __name__ == "__main__":
    key = jax.random.PRNGKey(0)
    k_params, k_x, k_eps = jax.random.split(key, 3)

    # Small shapes consistent with the module.
    shape = (4, 16, 16)           # (channels, height, width)
    batch = 2
    encoder_dims = (32, 32)
    decoder_dims = (32, 32)
    latent_dim = 8                # must be even

    params = init_mlp_vae_params(k_params, shape, encoder_dims, decoder_dims,
                                 latent_dim)

    x = jax.random.normal(k_x, (batch, *shape), dtype=jnp.float32)
    eps = jax.random.normal(k_eps, (batch, latent_dim), dtype=jnp.float32)

    x_hat, mean, logvar = mlp_vae_forward(params, x, eps, shape)
    jax.block_until_ready((x_hat, mean, logvar))

    assert x_hat.shape == (batch, *shape), x_hat.shape
    assert mean.shape == (batch, latent_dim), mean.shape
    assert logvar.shape == (batch, latent_dim), logvar.shape
    # Sigmoid output lies in [0, 1] (f32 sigmoid may saturate exactly).
    assert bool(jnp.all((x_hat >= 0.0) & (x_hat <= 1.0)))
    assert bool(jnp.all(jnp.isfinite(x_hat)))
    assert bool(jnp.all(jnp.isfinite(mean))) and bool(jnp.all(jnp.isfinite(logvar)))

    print("KERNEL_OK")
</pallas_src>

<mosaic_0001>
module attributes {stable_mosaic.version = 11 : i64} {
  func.func @_fused_vae_kernel(%arg0: i32, %arg1: memref<2x1024xf32, #tpu.memory_space<vmem>>, %arg2: memref<2x8xf32, #tpu.memory_space<vmem>>, %arg3: memref<1024x32xf32, #tpu.memory_space<vmem>>, %arg4: memref<1x32xf32, #tpu.memory_space<vmem>>, %arg5: memref<32x32xf32, #tpu.memory_space<vmem>>, %arg6: memref<1x32xf32, #tpu.memory_space<vmem>>, %arg7: memref<32x8xf32, #tpu.memory_space<vmem>>, %arg8: memref<1x8xf32, #tpu.memory_space<vmem>>, %arg9: memref<32x8xf32, #tpu.memory_space<vmem>>, %arg10: memref<1x8xf32, #tpu.memory_space<vmem>>, %arg11: memref<8x32xf32, #tpu.memory_space<vmem>>, %arg12: memref<1x32xf32, #tpu.memory_space<vmem>>, %arg13: memref<32x32xf32, #tpu.memory_space<vmem>>, %arg14: memref<1x32xf32, #tpu.memory_space<vmem>>, %arg15: memref<32x1024xf32, #tpu.memory_space<vmem>>, %arg16: memref<1x1024xf32, #tpu.memory_space<vmem>>, %arg17: memref<2x1024xf32, #tpu.memory_space<vmem>>, %arg18: memref<2x8xf32, #tpu.memory_space<vmem>>, %arg19: memref<2x8xf32, #tpu.memory_space<vmem>>) attributes {dimension_semantics = [#tpu.dimension_semantics<parallel>], iteration_bounds = array<i64: 1>, scalar_prefetch = 0 : i64, scratch_operands = 0 : i64, tpu.core_type = #tpu.core_type<tc>, window_params = [{transform_indices = @transform_0, window_bounds = array<i64: 2, 1024>}, {transform_indices = @transform_1, window_bounds = array<i64: 2, 8>}, {pipeline_mode = #tpu.pipeline_mode<synchronous>, transform_indices = @transform_2, window_bounds = array<i64: 1024, 32>}, {pipeline_mode = #tpu.pipeline_mode<synchronous>, transform_indices = @transform_3, window_bounds = array<i64: 1, 32>}, {pipeline_mode = #tpu.pipeline_mode<synchronous>, transform_indices = @transform_4, window_bounds = array<i64: 32, 32>}, {pipeline_mode = #tpu.pipeline_mode<synchronous>, transform_indices = @transform_5, window_bounds = array<i64: 1, 32>}, {pipeline_mode = #tpu.pipeline_mode<synchronous>, transform_indices = @transform_6, window_bounds = array<i64: 32, 8>}, {pipeline_mode = #tpu.pipeline_mode<synchronous>, transform_indices = @transform_7, window_bounds = array<i64: 1, 8>}, {pipeline_mode = #tpu.pipeline_mode<synchronous>, transform_indices = @transform_8, window_bounds = array<i64: 32, 8>}, {pipeline_mode = #tpu.pipeline_mode<synchronous>, transform_indices = @transform_9, window_bounds = array<i64: 1, 8>}, {pipeline_mode = #tpu.pipeline_mode<synchronous>, transform_indices = @transform_10, window_bounds = array<i64: 8, 32>}, {pipeline_mode = #tpu.pipeline_mode<synchronous>, transform_indices = @transform_11, window_bounds = array<i64: 1, 32>}, {pipeline_mode = #tpu.pipeline_mode<synchronous>, transform_indices = @transform_12, window_bounds = array<i64: 32, 32>}, {pipeline_mode = #tpu.pipeline_mode<synchronous>, transform_indices = @transform_13, window_bounds = array<i64: 1, 32>}, {pipeline_mode = #tpu.pipeline_mode<synchronous>, transform_indices = @transform_14, window_bounds = array<i64: 32, 1024>}, {pipeline_mode = #tpu.pipeline_mode<synchronous>, transform_indices = @transform_15, window_bounds = array<i64: 1, 1024>}, {transform_indices = @transform_16, window_bounds = array<i64: 2, 1024>}, {transform_indices = @transform_17, window_bounds = array<i64: 2, 8>}, {transform_indices = @transform_18, window_bounds = array<i64: 2, 8>}]} {
    %c0 = arith.constant 0 : index
    %c0_0 = arith.constant 0 : index
    %0 = vector.load %arg1[%c0, %c0_0] : memref<2x1024xf32, #tpu.memory_space<vmem>>, vector<2x1024xf32>
    %c0_1 = arith.constant 0 : index
    %c0_2 = arith.constant 0 : index
    %1 = vector.load %arg3[%c0_1, %c0_2] : memref<1024x32xf32, #tpu.memory_space<vmem>>, vector<1024x32xf32>
    %cst = arith.constant dense<0.000000e+00> : vector<2x32xf32>
    %2 = tpu.matmul %0, %1, %cst {dimension_numbers = #tpu.dot_dimension_numbers<[1], [0], [0], [1], [0, 0, 1, 1], [], []>} : vector<2x1024xf32>, vector<1024x32xf32>, vector<2x32xf32> -> vector<2x32xf32>
    %c0_3 = arith.constant 0 : index
    %c0_4 = arith.constant 0 : index
    %3 = vector.load %arg4[%c0_3, %c0_4] : memref<1x32xf32, #tpu.memory_space<vmem>>, vector<1x32xf32>
    %4 = vector.broadcast %3 : vector<1x32xf32> to vector<2x32xf32>
    %5 = arith.addf %2, %4 : vector<2x32xf32>
    %cst_5 = arith.constant 0.000000e+00 : f32
    %6 = vector.broadcast %cst_5 : f32 to vector<2x32xf32>
    %7 = arith.maximumf %5, %6 : vector<2x32xf32>
    %c0_6 = arith.constant 0 : index
    %c0_7 = arith.constant 0 : index
    %8 = vector.load %arg5[%c0_6, %c0_7] : memref<32x32xf32, #tpu.memory_space<vmem>>, vector<32x32xf32>
    %cst_8 = arith.constant dense<0.000000e+00> : vector<2x32xf32>
    %9 = tpu.matmul %7, %8, %cst_8 {dimension_numbers = #tpu.dot_dimension_numbers<[1], [0], [0], [1], [0, 0, 1, 1], [], []>} : vector<2x32xf32>, vector<32x32xf32>, vector<2x32xf32> -> vector<2x32xf32>
    %c0_9 = arith.constant 0 : index
    %c0_10 = arith.constant 0 : index
    %10 = vector.load %arg6[%c0_9, %c0_10] : memref<1x32xf32, #tpu.memory_space<vmem>>, vector<1x32xf32>
    %11 = vector.broadcast %10 : vector<1x32xf32> to vector<2x32xf32>
    %12 = arith.addf %9, %11 : vector<2x32xf32>
    %cst_11 = arith.constant 0.000000e+00 : f32
    %13 = vector.broadcast %cst_11 : f32 to vector<2x32xf32>
    %14 = arith.maximumf %12, %13 : vector<2x32xf32>
    %c0_12 = arith.constant 0 : index
    %c0_13 = arith.constant 0 : index
    %15 = vector.load %arg7[%c0_12, %c0_13] : memref<32x8xf32, #tpu.memory_space<vmem>>, vector<32x8xf32>
    %cst_14 = arith.constant dense<0.000000e+00> : vector<2x8xf32>
    %16 = tpu.matmul %14, %15, %cst_14 {dimension_numbers = #tpu.dot_dimension_numbers<[1], [0], [0], [1], [0, 0, 1, 1], [], []>} : vector<2x32xf32>, vector<32x8xf32>, vector<2x8xf32> -> vector<2x8xf32>
    %c0_15 = arith.constant 0 : index
    %c0_16 = arith.constant 0 : index
    %17 = vector.load %arg8[%c0_15, %c0_16] : memref<1x8xf32, #tpu.memory_space<vmem>>, vector<1x8xf32>
    %18 = vector.broadcast %17 : vector<1x8xf32> to vector<2x8xf32>
    %19 = arith.addf %16, %18 : vector<2x8xf32>
    %c0_17 = arith.constant 0 : index
    %c0_18 = arith.constant 0 : index
    %20 = vector.load %arg9[%c0_17, %c0_18] : memref<32x8xf32, #tpu.memory_space<vmem>>, vector<32x8xf32>
    %cst_19 = arith.constant dense<0.000000e+00> : vector<2x8xf32>
    %21 = tpu.matmul %14, %20, %cst_19 {dimension_numbers = #tpu.dot_dimension_numbers<[1], [0], [0], [1], [0, 0, 1, 1], [], []>} : vector<2x32xf32>, vector<32x8xf32>, vector<2x8xf32> -> vector<2x8xf32>
    %c0_20 = arith.constant 0 : index
    %c0_21 = arith.constant 0 : index
    %22 = vector.load %arg10[%c0_20, %c0_21] : memref<1x8xf32, #tpu.memory_space<vmem>>, vector<1x8xf32>
    %23 = vector.broadcast %22 : vector<1x8xf32> to vector<2x8xf32>
    %24 = arith.addf %21, %23 : vector<2x8xf32>
    %25 = math.exp %24 : vector<2x8xf32>
    %cst_22 = arith.constant 5.000000e-01 : f32
    %26 = vector.broadcast %cst_22 : f32 to vector<2x8xf32>
    %27 = arith.mulf %26, %25 : vector<2x8xf32>
    %c0_23 = arith.constant 0 : index
    %c0_24 = arith.constant 0 : index
    %28 = vector.load %arg2[%c0_23, %c0_24] : memref<2x8xf32, #tpu.memory_space<vmem>>, vector<2x8xf32>
    %29 = arith.mulf %28, %27 : vector<2x8xf32>
    %30 = arith.addf %19, %29 : vector<2x8xf32>
    %c0_25 = arith.constant 0 : index
    %c0_26 = arith.constant 0 : index
    %31 = vector.load %arg11[%c0_25, %c0_26] : memref<8x32xf32, #tpu.memory_space<vmem>>, vector<8x32xf32>
    %cst_27 = arith.constant dense<0.000000e+00> : vector<2x32xf32>
    %32 = tpu.matmul %30, %31, %cst_27 {dimension_numbers = #tpu.dot_dimension_numbers<[1], [0], [0], [1], [0, 0, 1, 1], [], []>} : vector<2x8xf32>, vector<8x32xf32>, vector<2x32xf32> -> vector<2x32xf32>
    %c0_28 = arith.constant 0 : index
    %c0_29 = arith.constant 0 : index
    %33 = vector.load %arg12[%c0_28, %c0_29] : memref<1x32xf32, #tpu.memory_space<vmem>>, vector<1x32xf32>
    %34 = vector.broadcast %33 : vector<1x32xf32> to vector<2x32xf32>
    %35 = arith.addf %32, %34 : vector<2x32xf32>
    %cst_30 = arith.constant 0.000000e+00 : f32
    %36 = vector.broadcast %cst_30 : f32 to vector<2x32xf32>
    %37 = arith.maximumf %35, %36 : vector<2x32xf32>
    %c0_31 = arith.constant 0 : index
    %c0_32 = arith.constant 0 : index
    %38 = vector.load %arg13[%c0_31, %c0_32] : memref<32x32xf32, #tpu.memory_space<vmem>>, vector<32x32xf32>
    %cst_33 = arith.constant dense<0.000000e+00> : vector<2x32xf32>
    %39 = tpu.matmul %37, %38, %cst_33 {dimension_numbers = #tpu.dot_dimension_numbers<[1], [0], [0], [1], [0, 0, 1, 1], [], []>} : vector<2x32xf32>, vector<32x32xf32>, vector<2x32xf32> -> vector<2x32xf32>
    %c0_34 = arith.constant 0 : index
    %c0_35 = arith.constant 0 : index
    %40 = vector.load %arg14[%c0_34, %c0_35] : memref<1x32xf32, #tpu.memory_space<vmem>>, vector<1x32xf32>
    %41 = vector.broadcast %40 : vector<1x32xf32> to vector<2x32xf32>
    %42 = arith.addf %39, %41 : vector<2x32xf32>
    %cst_36 = arith.constant 0.000000e+00 : f32
    %43 = vector.broadcast %cst_36 : f32 to vector<2x32xf32>
    %44 = arith.maximumf %42, %43 : vector<2x32xf32>
    %c0_37 = arith.constant 0 : index
    %c0_38 = arith.constant 0 : index
    %45 = vector.load %arg15[%c0_37, %c0_38] : memref<32x1024xf32, #tpu.memory_space<vmem>>, vector<32x1024xf32>
    %cst_39 = arith.constant dense<0.000000e+00> : vector<2x1024xf32>
    %46 = tpu.matmul %44, %45, %cst_39 {dimension_numbers = #tpu.dot_dimension_numbers<[1], [0], [0], [1], [0, 0, 1, 1], [], []>} : vector<2x32xf32>, vector<32x1024xf32>, vector<2x1024xf32> -> vector<2x1024xf32>
    %c0_40 = arith.constant 0 : index
    %c0_41 = arith.constant 0 : index
    %47 = vector.load %arg16[%c0_40, %c0_41] : memref<1x1024xf32, #tpu.memory_space<vmem>>, vector<1x1024xf32>
    %48 = vector.broadcast %47 : vector<1x1024xf32> to vector<2x1024xf32>
    %49 = arith.addf %46, %48 : vector<2x1024xf32>
    %50 = arith.negf %49 : vector<2x1024xf32>
    %51 = math.exp %50 : vector<2x1024xf32>
    %cst_42 = arith.constant 1.000000e+00 : f32
    %52 = vector.broadcast %cst_42 : f32 to vector<2x1024xf32>
    %53 = arith.addf %52, %51 : vector<2x1024xf32>
    %54 = arith.divf %52, %53 : vector<2x1024xf32>
    %c0_43 = arith.constant 0 : index
    %c0_44 = arith.constant 0 : index
    %55 = vector.load %arg17[%c0_43, %c0_44] : memref<2x1024xf32, #tpu.memory_space<vmem>>, vector<2x1024xf32>
    tpu.vector_store %arg17[%c0_43, %c0_44], %54 {strides = array<i32>} : memref<2x1024xf32, #tpu.memory_space<vmem>>, vector<2x1024xf32>,
    %c0_45 = arith.constant 0 : index
    %c0_46 = arith.constant 0 : index
    %56 = vector.load %arg18[%c0_45, %c0_46] : memref<2x8xf32, #tpu.memory_space<vmem>>, vector<2x8xf32>
    tpu.vector_store %arg18[%c0_45, %c0_46], %19 {strides = array<i32>} : memref<2x8xf32, #tpu.memory_space<vmem>>, vector<2x8xf32>,
    %c0_47 = arith.constant 0 : index
    %c0_48 = arith.constant 0 : index
    %57 = vector.load %arg19[%c0_47, %c0_48] : memref<2x8xf32, #tpu.memory_space<vmem>>, vector<2x8xf32>
    tpu.vector_store %arg19[%c0_47, %c0_48], %24 {strides = array<i32>} : memref<2x8xf32, #tpu.memory_space<vmem>>, vector<2x8xf32>,
    return
  }
  func.func @transform_0(%arg0: i32) -> (i32, i32) {
    %c0_i32 = arith.constant 0 : i32
    %c0_i32_0 = arith.constant 0 : i32
    return %arg0, %c0_i32 : i32, i32
  }
  func.func @transform_1(%arg0: i32) -> (i32, i32) {
    %c0_i32 = arith.constant 0 : i32
    %c0_i32_0 = arith.constant 0 : i32
    return %arg0, %c0_i32 : i32, i32
  }
  func.func @transform_2(%arg0: i32) -> (i32, i32) {
    %c0_i32 = arith.constant 0 : i32
    %c0_i32_0 = arith.constant 0 : i32
    %c0_i32_1 = arith.constant 0 : i32
    return %c0_i32, %c0_i32_0 : i32, i32
  }
  func.func @transform_3(%arg0: i32) -> (i32, i32) {
    %c0_i32 = arith.constant 0 : i32
    %c0_i32_0 = arith.constant 0 : i32
    %c0_i32_1 = arith.constant 0 : i32
    return %c0_i32, %c0_i32_0 : i32, i32
  }
  func.func @transform_4(%arg0: i32) -> (i32, i32) {
    %c0_i32 = arith.constant 0 : i32
    %c0_i32_0 = arith.constant 0 : i32
    %c0_i32_1 = arith.constant 0 : i32
    return %c0_i32, %c0_i32_0 : i32, i32
  }
  func.func @transform_5(%arg0: i32) -> (i32, i32) {
    %c0_i32 = arith.constant 0 : i32
    %c0_i32_0 = arith.constant 0 : i32
    %c0_i32_1 = arith.constant 0 : i32
    return %c0_i32, %c0_i32_0 : i32, i32
  }
  func.func @transform_6(%arg0: i32) -> (i32, i32) {
    %c0_i32 = arith.constant 0 : i32
    %c0_i32_0 = arith.constant 0 : i32
    %c0_i32_1 = arith.constant 0 : i32
    return %c0_i32, %c0_i32_0 : i32, i32
  }
  func.func @transform_7(%arg0: i32) -> (i32, i32) {
    %c0_i32 = arith.constant 0 : i32
    %c0_i32_0 = arith.constant 0 : i32
    %c0_i32_1 = arith.constant 0 : i32
    return %c0_i32, %c0_i32_0 : i32, i32
  }
  func.func @transform_8(%arg0: i32) -> (i32, i32) {
    %c0_i32 = arith.constant 0 : i32
    %c0_i32_0 = arith.constant 0 : i32
    %c0_i32_1 = arith.constant 0 : i32
    return %c0_i32, %c0_i32_0 : i32, i32
  }
  func.func @transform_9(%arg0: i32) -> (i32, i32) {
    %c0_i32 = arith.constant 0 : i32
    %c0_i32_0 = arith.constant 0 : i32
    %c0_i32_1 = arith.constant 0 : i32
    return %c0_i32, %c0_i32_0 : i32, i32
  }
  func.func @transform_10(%arg0: i32) -> (i32, i32) {
    %c0_i32 = arith.constant 0 : i32
    %c0_i32_0 = arith.constant 0 : i32
    %c0_i32_1 = arith.constant 0 : i32
    return %c0_i32, %c0_i32_0 : i32, i32
  }
  func.func @transform_11(%arg0: i32) -> (i32, i32) {
    %c0_i32 = arith.constant 0 : i32
    %c0_i32_0 = arith.constant 0 : i32
    %c0_i32_1 = arith.constant 0 : i32
    return %c0_i32, %c0_i32_0 : i32, i32
  }
  func.func @transform_12(%arg0: i32) -> (i32, i32) {
    %c0_i32 = arith.constant 0 : i32
    %c0_i32_0 = arith.constant 0 : i32
    %c0_i32_1 = arith.constant 0 : i32
    return %c0_i32, %c0_i32_0 : i32, i32
  }
  func.func @transform_13(%arg0: i32) -> (i32, i32) {
    %c0_i32 = arith.constant 0 : i32
    %c0_i32_0 = arith.constant 0 : i32
    %c0_i32_1 = arith.constant 0 : i32
    return %c0_i32, %c0_i32_0 : i32, i32
  }
  func.func @transform_14(%arg0: i32) -> (i32, i32) {
    %c0_i32 = arith.constant 0 : i32
    %c0_i32_0 = arith.constant 0 : i32
    %c0_i32_1 = arith.constant 0 : i32
    return %c0_i32, %c0_i32_0 : i32, i32
  }
  func.func @transform_15(%arg0: i32) -> (i32, i32) {
    %c0_i32 = arith.constant 0 : i32
    %c0_i32_0 = arith.constant 0 : i32
    %c0_i32_1 = arith.constant 0 : i32
    return %c0_i32, %c0_i32_0 : i32, i32
  }
  func.func @transform_16(%arg0: i32) -> (i32, i32) {
    %c0_i32 = arith.constant 0 : i32
    %c0_i32_0 = arith.constant 0 : i32
    return %arg0, %c0_i32 : i32, i32
  }
  func.func @transform_17(%arg0: i32) -> (i32, i32) {
    %c0_i32 = arith.constant 0 : i32
    %c0_i32_0 = arith.constant 0 : i32
    return %arg0, %c0_i32 : i32, i32
  }
  func.func @transform_18(%arg0: i32) -> (i32, i32) {
    %c0_i32 = arith.constant 0 : i32
    %c0_i32_0 = arith.constant 0 : i32
    return %arg0, %c0_i32 : i32, i32
  }
}

</mosaic_0001>

<llo_original>
// kernel: tpu_custom_call.1
$region0: #{tpu_custom_call.1}
  #allocation0 [shape = 'u32[]', space=smem, size = 0x4, offset = 0x4, fixed_abs, tag = 'smem constant byte address 0x4 - core index']
  #allocation1 [shape = 'u32[144,128]{1,0:T(1,128)}', space=vmem, size = 0x12000, scoped, tag = 'internal scratch']
  %s0 = inlined_call_operand.vmem [shape: f32[2,1024], index: 0, kind: input, shape index: {}]
  %s1 = inlined_call_operand.vmem [shape: f32[2,8], index: 1, kind: input, shape index: {}]
  %s2 = inlined_call_operand.vmem [shape: f32[1024,32], index: 2, kind: input, shape index: {}]
  %s3 = inlined_call_operand.vmem [shape: f32[1,32], index: 3, kind: input, shape index: {}]
  %s4 = inlined_call_operand.vmem [shape: f32[32,32], index: 4, kind: input, shape index: {}]
  %s5 = inlined_call_operand.vmem [shape: f32[1,32], index: 5, kind: input, shape index: {}]
  %s6 = inlined_call_operand.vmem [shape: f32[32,8], index: 6, kind: input, shape index: {}]
  %s7 = inlined_call_operand.vmem [shape: f32[1,8], index: 7, kind: input, shape index: {}]
  %s8 = inlined_call_operand.vmem [shape: f32[32,8], index: 8, kind: input, shape index: {}]
  %s9 = inlined_call_operand.vmem [shape: f32[1,8], index: 9, kind: input, shape index: {}]
  %s10 = inlined_call_operand.vmem [shape: f32[8,32], index: 10, kind: input, shape index: {}]
  %s11 = inlined_call_operand.vmem [shape: f32[1,32], index: 11, kind: input, shape index: {}]
  %s12 = inlined_call_operand.vmem [shape: f32[32,32], index: 12, kind: input, shape index: {}]
  %s13 = inlined_call_operand.vmem [shape: f32[1,32], index: 13, kind: input, shape index: {}]
  %s14 = inlined_call_operand.vmem [shape: f32[32,1024], index: 14, kind: input, shape index: {}]
  %s15 = inlined_call_operand.vmem [shape: f32[1,1024], index: 15, kind: input, shape index: {}]
  %s16 = inlined_call_operand.hbm [shape: f32[2,1024], index: 16, kind: output, shape index: {0}]
  %s17 = inlined_call_operand.hbm [shape: f32[2,8], index: 17, kind: output, shape index: {1}]
  %s18 = inlined_call_operand.hbm [shape: f32[2,8], index: 18, kind: output, shape index: {2}]
  %19 = xla_tuple %s16, %s17, %s18
  %s20 = sld [smem:[#allocation0]]
  $region90: #{tpu_custom_call.1} parent=0
    _
  %s22 = ssub.s32 1, %s20
  %s23 = scalar_select 0, %s22, %s20
  $region1: #{tpu_custom_call.1} parent=0
    #allocation2 [shape = 'u8[8192]{0}', space=vmem, size = 0x2000, scoped, tag = 'output window, operand 0, single buffered']
    #allocation3 [shape = 's32[1]{0}', space=sflag, size = 0x4, scoped, tag = 'scoped memory for tpu_custom_call.1']
    #allocation4 [shape = 'u8[1024]{0}', space=vmem, size = 0x400, scoped, tag = 'output window, operand 1, single buffered']
    #allocation5 [shape = 's32[1]{0}', space=sflag, size = 0x4, scoped, tag = 'scoped memory for tpu_custom_call.1']
    #allocation6 [shape = 'u8[1024]{0}', space=vmem, size = 0x400, scoped, tag = 'output window, operand 2, single buffered']
    %24 = vsyncpa [#allocation3], 0
    %25 = vsyncpa [#allocation5], 0
    // Predicated region
    $region2: #{tpu_custom_call.1} parent=1 // pred_check
      _
    $region3: #{tpu_custom_call.1} parent=1 // pred_check_branch
      %27 = sbr.rel (0) target = $region5
    $region4: #{tpu_custom_call.1} parent=1 // pred_region
      _
    $region5: #{tpu_custom_call.1} parent=1 // pred_fallthru
      _
    // Predicated region
    $region6: #{tpu_custom_call.1} parent=1 // pred_check
      _
    $region7: #{tpu_custom_call.1} parent=1 // pred_check_branch
      %29 = sbr.rel (0) target = $region9
    $region8: #{tpu_custom_call.1} parent=1 // pred_region
      _
    $region9: #{tpu_custom_call.1} parent=1 // pred_fallthru
      _
    // Predicated region
    $region10: #{tpu_custom_call.1} parent=1 // pred_check
      _
    $region11: #{tpu_custom_call.1} parent=1 // pred_check_branch
      %31 = sbr.rel (0) target = $region13
    $region12: #{tpu_custom_call.1} parent=1 // pred_region
      _
    $region13: #{tpu_custom_call.1} parent=1 // pred_fallthru
      _
    // Predicated region
    $region14: #{tpu_custom_call.1} parent=1 // pred_check
      _
    $region15: #{tpu_custom_call.1} parent=1 // pred_check_branch
      %33 = sbr.rel (0) target = $region17
    $region16: #{tpu_custom_call.1} parent=1 // pred_region
      _
    $region17: #{tpu_custom_call.1} parent=1 // pred_fallthru
      _
    // Predicated region
    $region18: #{tpu_custom_call.1} parent=1 // pred_check
      _
    $region19: #{tpu_custom_call.1} parent=1 // pred_check_branch
      %35 = sbr.rel (0) target = $region21
    $region20: #{tpu_custom_call.1} parent=1 // pred_region
      _
    $region21: #{tpu_custom_call.1} parent=1 // pred_fallthru
      _
    // Predicated region
    $region22: #{tpu_custom_call.1} parent=1 // pred_check
      _
    $region23: #{tpu_custom_call.1} parent=1 // pred_check_branch
      %37 = sbr.rel (0) target = $region25
    $region24: #{tpu_custom_call.1} parent=1 // pred_region
      _
    $region25: #{tpu_custom_call.1} parent=1 // pred_fallthru
      _
    // Predicated region
    $region26: #{tpu_custom_call.1} parent=1 // pred_check
      _
    $region27: #{tpu_custom_call.1} parent=1 // pred_check_branch
      %39 = sbr.rel (0) target = $region29
    $region28: #{tpu_custom_call.1} parent=1 // pred_region
      _
    $region29: #{tpu_custom_call.1} parent=1 // pred_fallthru
      _
    // Predicated region
    $region30: #{tpu_custom_call.1} parent=1 // pred_check
      _
    $region31: #{tpu_custom_call.1} parent=1 // pred_check_branch
      %41 = sbr.rel (0) target = $region33
    $region32: #{tpu_custom_call.1} parent=1 // pred_region
      _
    $region33: #{tpu_custom_call.1} parent=1 // pred_fallthru
      _
    // Predicated region
    $region34: #{tpu_custom_call.1} parent=1 // pred_check
      _
    $region35: #{tpu_custom_call.1} parent=1 // pred_check_branch
      %43 = sbr.rel (0) target = $region37
    $region36: #{tpu_custom_call.1} parent=1 // pred_region
      _
    $region37: #{tpu_custom_call.1} parent=1 // pred_fallthru
      _
    // Predicated region
    $region38: #{tpu_custom_call.1} parent=1 // pred_check
      _
    $region39: #{tpu_custom_call.1} parent=1 // pred_check_branch
      %45 = sbr.rel (0) target = $region41
    $region40: #{tpu_custom_call.1} parent=1 // pred_region
      _
    $region41: #{tpu_custom_call.1} parent=1 // pred_fallthru
      _
    // Predicated region
    $region42: #{tpu_custom_call.1} parent=1 // pred_check
      _
    $region43: #{tpu_custom_call.1} parent=1 // pred_check_branch
      %47 = sbr.rel (0) target = $region45
    $region44: #{tpu_custom_call.1} parent=1 // pred_region
      _
    $region45: #{tpu_custom_call.1} parent=1 // pred_fallthru
      _
    // Predicated region
    $region46: #{tpu_custom_call.1} parent=1 // pred_check
      _
    $region47: #{tpu_custom_call.1} parent=1 // pred_check_branch
      %49 = sbr.rel (0) target = $region49
    $region48: #{tpu_custom_call.1} parent=1 // pred_region
      _
    $region49: #{tpu_custom_call.1} parent=1 // pred_fallthru
      _
    // Predicated region
    $region50: #{tpu_custom_call.1} parent=1 // pred_check
      _
    $region51: #{tpu_custom_call.1} parent=1 // pred_check_branch
      %51 = sbr.rel (0) target = $region53
    $region52: #{tpu_custom_call.1} parent=1 // pred_region
      _
    $region53: #{tpu_custom_call.1} parent=1 // pred_fallthru
      _
    // Predicated region
    $region54: #{tpu_custom_call.1} parent=1 // pred_check
      _
    $region55: #{tpu_custom_call.1} parent=1 // pred_check_branch
      %53 = sbr.rel (0) target = $region57
    $region56: #{tpu_custom_call.1} parent=1 // pred_region
      _
    $region57: #{tpu_custom_call.1} parent=1 // pred_fallthru
      _
    // Predicated region
    $region58: #{tpu_custom_call.1} parent=1 // pred_check
      _
    $region59: #{tpu_custom_call.1} parent=1 // pred_check_branch
      %55 = sbr.rel (0) target = $region61
    $region60: #{tpu_custom_call.1} parent=1 // pred_region
      _
    $region61: #{tpu_custom_call.1} parent=1 // pred_fallthru
      _
    // Predicated region
    $region62: #{tpu_custom_call.1} parent=1 // pred_check
      _
    $region63: #{tpu_custom_call.1} parent=1 // pred_check_branch
      %57 = sbr.rel (0) target = $region65
    $region64: #{tpu_custom_call.1} parent=1 // pred_region
      _
    $region65: #{tpu_custom_call.1} parent=1 // pred_fallthru
      _
    %v58 = vld [vmem:[%s0] sm:$0xff]
    %v59 = vld [vmem:[%s0 + $0x8] sm:$0xff]
    %v60 = vld [vmem:[%s2] sm:$0xff]
    %v61 = vld [vmem:[%s2 + $0x8] sm:$0xff]
    %v62 = vld [vmem:[%s2 + $0x10] sm:$0xff]
    %v63 = vld [vmem:[%s2 + $0x18] sm:$0xff]
    %v64 = vld [vmem:[%s2 + $0x20] sm:$0xff]
    %v65 = vld [vmem:[%s2 + $0x28] sm:$0xff]
    %v66 = vld [vmem:[%s2 + $0x30] sm:$0xff]
    %v67 = vld [vmem:[%s2 + $0x38] sm:$0xff]
    %v68 = vld [vmem:[%s2 + $0x40] sm:$0xff]
    %v69 = vld [vmem:[%s2 + $0x48] sm:$0xff]
    %v70 = vld [vmem:[%s2 + $0x50] sm:$0xff]
    %v71 = vld [vmem:[%s2 + $0x58] sm:$0xff]
    %v72 = vld [vmem:[%s2 + $0x60] sm:$0xff]
    %v73 = vld [vmem:[%s2 + $0x68] sm:$0xff]
    %v74 = vld [vmem:[%s2 + $0x70] sm:$0xff]
    %v75 = vld [vmem:[%s2 + $0x78] sm:$0xff]
    %v76 = vld [vmem:[%s2 + $0x80] sm:$0xff]
    %v77 = vld [vmem:[%s2 + $0x88] sm:$0xff]
    %v78 = vld [vmem:[%s2 + $0x90] sm:$0xff]
    %v79 = vld [vmem:[%s2 + $0x98] sm:$0xff]
    %v80 = vld [vmem:[%s2 + $0xa0] sm:$0xff]
    %v81 = vld [vmem:[%s2 + $0xa8] sm:$0xff]
    %v82 = vld [vmem:[%s2 + $0xb0] sm:$0xff]
    %v83 = vld [vmem:[%s2 + $0xb8] sm:$0xff]
    %v84 = vld [vmem:[%s2 + $0xc0] sm:$0xff]
    %v85 = vld [vmem:[%s2 + $0xc8] sm:$0xff]
    %v86 = vld [vmem:[%s2 + $0xd0] sm:$0xff]
    %v87 = vld [vmem:[%s2 + $0xd8] sm:$0xff]
    %v88 = vld [vmem:[%s2 + $0xe0] sm:$0xff]
    %v89 = vld [vmem:[%s2 + $0xe8] sm:$0xff]
    %v90 = vld [vmem:[%s2 + $0xf0] sm:$0xff]
    %v91 = vld [vmem:[%s2 + $0xf8] sm:$0xff]
    %v92 = vld [vmem:[%s2 + $0x100] sm:$0xff]
    %v93 = vld [vmem:[%s2 + $0x108] sm:$0xff]
    %v94 = vld [vmem:[%s2 + $0x110] sm:$0xff]
    %v95 = vld [vmem:[%s2 + $0x118] sm:$0xff]
    %v96 = vld [vmem:[%s2 + $0x120] sm:$0xff]
    %v97 = vld [vmem:[%s2 + $0x128] sm:$0xff]
    %v98 = vld [vmem:[%s2 + $0x130] sm:$0xff]
    %v99 = vld [vmem:[%s2 + $0x138] sm:$0xff]
    %v100 = vld [vmem:[%s2 + $0x140] sm:$0xff]
    %v101 = vld [vmem:[%s2 + $0x148] sm:$0xff]
    %v102 = vld [vmem:[%s2 + $0x150] sm:$0xff]
    %v103 = vld [vmem:[%s2 + $0x158] sm:$0xff]
    %v104 = vld [vmem:[%s2 + $0x160] sm:$0xff]
    %v105 = vld [vmem:[%s2 + $0x168] sm:$0xff]
    %v106 = vld [vmem:[%s2 + $0x170] sm:$0xff]
    %v107 = vld [vmem:[%s2 + $0x178] sm:$0xff]
    %v108 = vld [vmem:[%s2 + $0x180] sm:$0xff]
    %v109 = vld [vmem:[%s2 + $0x188] sm:$0xff]
    %v110 = vld [vmem:[%s2 + $0x190] sm:$0xff]
    %v111 = vld [vmem:[%s2 + $0x198] sm:$0xff]
    %v112 = vld [vmem:[%s2 + $0x1a0] sm:$0xff]
    %v113 = vld [vmem:[%s2 + $0x1a8] sm:$0xff]
    %v114 = vld [vmem:[%s2 + $0x1b0] sm:$0xff]
    %v115 = vld [vmem:[%s2 + $0x1b8] sm:$0xff]
    %v116 = vld [vmem:[%s2 + $0x1c0] sm:$0xff]
    %v117 = vld [vmem:[%s2 + $0x1c8] sm:$0xff]
    %v118 = vld [vmem:[%s2 + $0x1d0] sm:$0xff]
    %v119 = vld [vmem:[%s2 + $0x1d8] sm:$0xff]
    %v120 = vld [vmem:[%s2 + $0x1e0] sm:$0xff]
    %v121 = vld [vmem:[%s2 + $0x1e8] sm:$0xff]
    %v122 = vld [vmem:[%s2 + $0x1f0] sm:$0xff]
    %v123 = vld [vmem:[%s2 + $0x1f8] sm:$0xff]
    %v124 = vld [vmem:[%s2 + $0x200] sm:$0xff]
    %v125 = vld [vmem:[%s2 + $0x208] sm:$0xff]
    %v126 = vld [vmem:[%s2 + $0x210] sm:$0xff]
    %v127 = vld [vmem:[%s2 + $0x218] sm:$0xff]
    %v128 = vld [vmem:[%s2 + $0x220] sm:$0xff]
    %v129 = vld [vmem:[%s2 + $0x228] sm:$0xff]
    %v130 = vld [vmem:[%s2 + $0x230] sm:$0xff]
    %v131 = vld [vmem:[%s2 + $0x238] sm:$0xff]
    %v132 = vld [vmem:[%s2 + $0x240] sm:$0xff]
    %v133 = vld [vmem:[%s2 + $0x248] sm:$0xff]
    %v134 = vld [vmem:[%s2 + $0x250] sm:$0xff]
    %v135 = vld [vmem:[%s2 + $0x258] sm:$0xff]
    %v136 = vld [vmem:[%s2 + $0x260] sm:$0xff]
    %v137 = vld [vmem:[%s2 + $0x268] sm:$0xff]
    %v138 = vld [vmem:[%s2 + $0x270] sm:$0xff]
    %v139 = vld [vmem:[%s2 + $0x278] sm:$0xff]
    %v140 = vld [vmem:[%s2 + $0x280] sm:$0xff]
    %v141 = vld [vmem:[%s2 + $0x288] sm:$0xff]
    %v142 = vld [vmem:[%s2 + $0x290] sm:$0xff]
    %v143 = vld [vmem:[%s2 + $0x298] sm:$0xff]
    %v144 = vld [vmem:[%s2 + $0x2a0] sm:$0xff]
    %v145 = vld [vmem:[%s2 + $0x2a8] sm:$0xff]
    %v146 = vld [vmem:[%s2 + $0x2b0] sm:$0xff]
    %v147 = vld [vmem:[%s2 + $0x2b8] sm:$0xff]
    %v148 = vld [vmem:[%s2 + $0x2c0] sm:$0xff]
    %v149 = vld [vmem:[%s2 + $0x2c8] sm:$0xff]
    %v150 = vld [vmem:[%s2 + $0x2d0] sm:$0xff]
    %v151 = vld [vmem:[%s2 + $0x2d8] sm:$0xff]
    %v152 = vld [vmem:[%s2 + $0x2e0] sm:$0xff]
    %v153 = vld [vmem:[%s2 + $0x2e8] sm:$0xff]
    %v154 = vld [vmem:[%s2 + $0x2f0] sm:$0xff]
    %v155 = vld [vmem:[%s2 + $0x2f8] sm:$0xff]
    %v156 = vld [vmem:[%s2 + $0x300] sm:$0xff]
    %v157 = vld [vmem:[%s2 + $0x308] sm:$0xff]
    %v158 = vld [vmem:[%s2 + $0x310] sm:$0xff]
    %v159 = vld [vmem:[%s2 + $0x318] sm:$0xff]
    %v160 = vld [vmem:[%s2 + $0x320] sm:$0xff]
    %v161 = vld [vmem:[%s2 + $0x328] sm:$0xff]
    %v162 = vld [vmem:[%s2 + $0x330] sm:$0xff]
    %v163 = vld [vmem:[%s2 + $0x338] sm:$0xff]
    %v164 = vld [vmem:[%s2 + $0x340] sm:$0xff]
    %v165 = vld [vmem:[%s2 + $0x348] sm:$0xff]
    %v166 = vld [vmem:[%s2 + $0x350] sm:$0xff]
    %v167 = vld [vmem:[%s2 + $0x358] sm:$0xff]
    %v168 = vld [vmem:[%s2 + $0x360] sm:$0xff]
    %v169 = vld [vmem:[%s2 + $0x368] sm:$0xff]
    %v170 = vld [vmem:[%s2 + $0x370] sm:$0xff]
    %v171 = vld [vmem:[%s2 + $0x378] sm:$0xff]
    %v172 = vld [vmem:[%s2 + $0x380] sm:$0xff]
    %v173 = vld [vmem:[%s2 + $0x388] sm:$0xff]
    %v174 = vld [vmem:[%s2 + $0x390] sm:$0xff]
    %v175 = vld [vmem:[%s2 + $0x398] sm:$0xff]
    %v176 = vld [vmem:[%s2 + $0x3a0] sm:$0xff]
    %v177 = vld [vmem:[%s2 + $0x3a8] sm:$0xff]
    %v178 = vld [vmem:[%s2 + $0x3b0] sm:$0xff]
    %v179 = vld [vmem:[%s2 + $0x3b8] sm:$0xff]
    %v180 = vld [vmem:[%s2 + $0x3c0] sm:$0xff]
    %v181 = vld [vmem:[%s2 + $0x3c8] sm:$0xff]
    %v182 = vld [vmem:[%s2 + $0x3d0] sm:$0xff]
    %v183 = vld [vmem:[%s2 + $0x3d8] sm:$0xff]
    %v184 = vld [vmem:[%s2 + $0x3e0] sm:$0xff]
    %v185 = vld [vmem:[%s2 + $0x3e8] sm:$0xff]
    %v186 = vld [vmem:[%s2 + $0x3f0] sm:$0xff]
    %v187 = vld [vmem:[%s2 + $0x3f8] sm:$0xff]
    %v188 = vld [vmem:[%s3] sm:$0x1]
    %v190 = vlaneseq
    %v191 = vshrl.u32 %v190, 7
    %v192 = vsub.s32 0, %v191
    %v193 = vrot.slane %v188, %v192
    %v197 = vcombine.high %v58, %v58
    %v199 = vunpack.c.l.s4 1983009808
    %v200 = vunpack.c.0.s8 %v199
    %v201 = vlaneseq
    %v202 = vshrl.u32 %v201, 7
    %v203 = vsub.s32 %v200, %v202
    %v204 = vrot.slane %v58, %v203
    %v206 = vunpack.c.l.s4 1983009808
    %v207 = vunpack.c.0.s8 %v206
    %v208 = vlaneseq
    %v209 = vshrl.u32 %v208, 7
    %v210 = vsub.s32 %v207, %v209
    %v211 = vrot.slane %v197, %v210
    %v212 = vcombine.high %v204, %v204
    %v213 = vcombine.high %v211, %v211
    %v214 = vcombine.high %v59, %v59
    %v216 = vunpack.c.l.s4 1983009808
    %v217 = vunpack.c.0.s8 %v216
    %v218 = vlaneseq
    %v219 = vshrl.u32 %v218, 7
    %v220 = vsub.s32 %v217, %v219
    %v221 = vrot.slane %v59, %v220
    %v223 = vunpack.c.l.s4 1983009808
    %v224 = vunpack.c.0.s8 %v223
    %v225 = vlaneseq
    %v226 = vshrl.u32 %v225, 7
    %v227 = vsub.s32 %v224, %v226
    %v228 = vrot.slane %v214, %v227
    %v229 = vcombine.high %v221, %v221
    %v230 = vcombine.high %v228, %v228
    %239 = vmatprep.subr.mxu0 0.0
    %240 = vmatpush1.msra.mxu0 %v60
    %241 = vmatprep.subr.mxu0 0.0
    %242 = vmatpush1.msra.mxu0 %v61
    %243 = vmatprep.subr.mxu0 0.0
    %244 = vmatpush1.msra.mxu0 %v62
    %245 = vmatprep.subr.mxu0 0.0
    %246 = vmatpush1.msra.mxu0 %v63
    %247 = vmatprep.subr.mxu0 0.0
    %248 = vmatpush1.msra.mxu0 %v64
    %249 = vmatprep.subr.mxu0 0.0
    %250 = vmatpush1.msra.mxu0 %v65
    %251 = vmatprep.subr.mxu0 0.0
    %252 = vmatpush1.msra.mxu0 %v66
    %253 = vmatprep.subr.mxu0 0.0
    %254 = vmatpush1.msra.mxu0 %v67
    %255 = vmatprep.subr.mxu0 0.0
    %256 = vmatpush1.msra.mxu0 %v68
    %257 = vmatprep.subr.mxu0 0.0
    %258 = vmatpush1.msra.mxu0 %v69
    %259 = vmatprep.subr.mxu0 0.0
    %260 = vmatpush1.msra.mxu0 %v70
    %261 = vmatprep.subr.mxu0 0.0
    %262 = vmatpush1.msra.mxu0 %v71
    %263 = vmatprep.subr.mxu0 0.0
    %264 = vmatpush1.msra.mxu0 %v72
    %265 = vmatprep.subr.mxu0 0.0
    %266 = vmatpush1.msra.mxu0 %v73
    %267 = vmatprep.subr.mxu0 0.0
    %268 = vmatpush1.msra.mxu0 %v74
    %269 = vmatprep.subr.mxu0 0.0
    %270 = vmatpush1.msra.mxu0 %v75
    %271 = vmatprep.subr.mxu0 0.0
    %272 = vmatpush1.msra.mxu0 %v76
    %273 = vmatprep.subr.mxu0 0.0
    %274 = vmatpush1.msra.mxu0 %v77
    %275 = vmatprep.subr.mxu0 0.0
    %276 = vmatpush1.msra.mxu0 %v78
    %277 = vmatprep.subr.mxu0 0.0
    %278 = vmatpush1.msra.mxu0 %v79
    %279 = vmatprep.subr.mxu0 0.0
    %280 = vmatpush1.msra.mxu0 %v80
    %281 = vmatprep.subr.mxu0 0.0
    %282 = vmatpush1.msra.mxu0 %v81
    %283 = vmatprep.subr.mxu0 0.0
    %284 = vmatpush1.msra.mxu0 %v82
    %285 = vmatprep.subr.mxu0 0.0
    %286 = vmatpush1.msra.mxu0 %v83
    %287 = vmatprep.subr.mxu0 0.0
    %288 = vmatpush1.msra.mxu0 %v84
    %289 = vmatprep.subr.mxu0 0.0
    %290 = vmatpush1.msra.mxu0 %v85
    %291 = vmatprep.subr.mxu0 0.0
    %292 = vmatpush1.msra.mxu0 %v86
    %293 = vmatprep.subr.mxu0 0.0
    %294 = vmatpush1.msra.mxu0 %v87
    %295 = vmatprep.subr.mxu0 0.0
    %296 = vmatpush1.msra.mxu0 %v88
    %297 = vmatprep.subr.mxu0 0.0
    %298 = vmatpush1.msra.mxu0 %v89
    %299 = vmatprep.subr.mxu0 0.0
    %300 = vmatpush1.msra.mxu0 %v90
    %301 = vmatprep.subr.mxu0 0.0
    %302 = vmatpush1.msra.mxu0 %v91
    %303 = vmatprep.mubr.f32.mxu0 %v212
    %304 = vmatmul.mubr.f32.gmra.mrb[0].mxu0 %v204
    %v305 = vpop.f32.mrb[0].mxu0
    %v306 = vadd.f32 %v193, %v305
    %v307 = vpop.f32.mrb[0].mxu0
    %308 = vdwg.mxu0
    %309 = vmatprep.subr.mxu0 0.0
    %310 = vmatpush1.msra.mxu0 %v92
    %311 = vmatprep.subr.mxu0 0.0
    %312 = vmatpush1.msra.mxu0 %v93
    %313 = vmatprep.subr.mxu0 0.0
    %314 = vmatpush1.msra.mxu0 %v94
    %315 = vmatprep.subr.mxu0 0.0
    %316 = vmatpush1.msra.mxu0 %v95
    %317 = vmatprep.subr.mxu0 0.0
    %318 = vmatpush1.msra.mxu0 %v96
    %319 = vmatprep.subr.mxu0 0.0
    %320 = vmatpush1.msra.mxu0 %v97
    %321 = vmatprep.subr.mxu0 0.0
    %322 = vmatpush1.msra.mxu0 %v98
    %323 = vmatprep.subr.mxu0 0.0
    %324 = vmatpush1.msra.mxu0 %v99
    %325 = vmatprep.subr.mxu0 0.0
    %326 = vmatpush1.msra.mxu0 %v100
    %327 = vmatprep.subr.mxu0 0.0
    %328 = vmatpush1.msra.mxu0 %v101
    %329 = vmatprep.subr.mxu0 0.0
    %330 = vmatpush1.msra.mxu0 %v102
    %331 = vmatprep.subr.mxu0 0.0
    %332 = vmatpush1.msra.mxu0 %v103
    %333 = vmatprep.subr.mxu0 0.0
    %334 = vmatpush1.msra.mxu0 %v104
    %335 = vmatprep.subr.mxu0 0.0
    %336 = vmatpush1.msra.mxu0 %v105
    %337 = vmatprep.subr.mxu0 0.0
    %338 = vmatpush1.msra.mxu0 %v106
    %339 = vmatprep.subr.mxu0 0.0
    %340 = vmatpush1.msra.mxu0 %v107
    %341 = vmatprep.subr.mxu0 0.0
    %342 = vmatpush1.msra.mxu0 %v108
    %343 = vmatprep.subr.mxu0 0.0
    %344 = vmatpush1.msra.mxu0 %v109
    %345 = vmatprep.subr.mxu0 0.0
    %346 = vmatpush1.msra.mxu0 %v110
    %347 = vmatprep.subr.mxu0 0.0
    %348 = vmatpush1.msra.mxu0 %v111
    %349 = vmatprep.subr.mxu0 0.0
    %350 = vmatpush1.msra.mxu0 %v112
    %351 = vmatprep.subr.mxu0 0.0
    %352 = vmatpush1.msra.mxu0 %v113
    %353 = vmatprep.subr.mxu0 0.0
    %354 = vmatpush1.msra.mxu0 %v114
    %355 = vmatprep.subr.mxu0 0.0
    %356 = vmatpush1.msra.mxu0 %v115
    %357 = vmatprep.subr.mxu0 0.0
    %358 = vmatpush1.msra.mxu0 %v116
    %359 = vmatprep.subr.mxu0 0.0
    %360 = vmatpush1.msra.mxu0 %v117
    %361 = vmatprep.subr.mxu0 0.0
    %362 = vmatpush1.msra.mxu0 %v118
    %363 = vmatprep.subr.mxu0 0.0
    %364 = vmatpush1.msra.mxu0 %v119
    %365 = vmatprep.subr.mxu0 0.0
    %366 = vmatpush1.msra.mxu0 %v120
    %367 = vmatprep.subr.mxu0 0.0
    %368 = vmatpush1.msra.mxu0 %v121
    %369 = vmatprep.subr.mxu0 0.0
    %370 = vmatpush1.msra.mxu0 %v122
    %371 = vmatprep.subr.mxu0 0.0
    %372 = vmatpush1.msra.mxu0 %v123
    %373 = vmatprep.mubr.f32.mxu0 %v213
    %374 = vmatmul.mubr.f32.gmra.mrb[0].mxu0 %v211
    %v375 = vpop.f32.mrb[0].mxu0
    %v376 = vadd.f32 %v306, %v375
    %v377 = vpop.f32.mrb[0].mxu0
    %378 = vdwg.mxu0
    %379 = vmatprep.subr.mxu0 0.0
    %380 = vmatpush1.msra.mxu0 %v124
    %381 = vmatprep.subr.mxu0 0.0
    %382 = vmatpush1.msra.mxu0 %v125
    %383 = vmatprep.subr.mxu0 0.0
    %384 = vmatpush1.msra.mxu0 %v126
    %385 = vmatprep.subr.mxu0 0.0
    %386 = vmatpush1.msra.mxu0 %v127
    %387 = vmatprep.subr.mxu0 0.0
    %388 = vmatpush1.msra.mxu0 %v128
    %389 = vmatprep.subr.mxu0 0.0
    %390 = vmatpush1.msra.mxu0 %v129
    %391 = vmatprep.subr.mxu0 0.0
    %392 = vmatpush1.msra.mxu0 %v130
    %393 = vmatprep.subr.mxu0 0.0
    %394 = vmatpush1.msra.mxu0 %v131
    %395 = vmatprep.subr.mxu0 0.0
    %396 = vmatpush1.msra.mxu0 %v132
    %397 = vmatprep.subr.mxu0 0.0
    %398 = vmatpush1.msra.mxu0 %v133
    %399 = vmatprep.subr.mxu0 0.0
    %400 = vmatpush1.msra.mxu0 %v134
    %401 = vmatprep.subr.mxu0 0.0
    %402 = vmatpush1.msra.mxu0 %v135
    %403 = vmatprep.subr.mxu0 0.0
    %404 = vmatpush1.msra.mxu0 %v136
    %405 = vmatprep.subr.mxu0 0.0
    %406 = vmatpush1.msra.mxu0 %v137
    %407 = vmatprep.subr.mxu0 0.0
    %408 = vmatpush1.msra.mxu0 %v138
    %409 = vmatprep.subr.mxu0 0.0
    %410 = vmatpush1.msra.mxu0 %v139
    %411 = vmatprep.subr.mxu0 0.0
    %412 = vmatpush1.msra.mxu0 %v140
    %413 = vmatprep.subr.mxu0 0.0
    %414 = vmatpush1.msra.mxu0 %v141
    %415 = vmatprep.subr.mxu0 0.0
    %416 = vmatpush1.msra.mxu0 %v142
    %417 = vmatprep.subr.mxu0 0.0
    %418 = vmatpush1.msra.mxu0 %v143
    %419 = vmatprep.subr.mxu0 0.0
    %420 = vmatpush1.msra.mxu0 %v144
    %421 = vmatprep.subr.mxu0 0.0
    %422 = vmatpush1.msra.mxu0 %v145
    %423 = vmatprep.subr.mxu0 0.0
    %424 = vmatpush1.msra.mxu0 %v146
    %425 = vmatprep.subr.mxu0 0.0
    %426 = vmatpush1.msra.mxu0 %v147
    %427 = vmatprep.subr.mxu0 0.0
    %428 = vmatpush1.msra.mxu0 %v148
    %429 = vmatprep.subr.mxu0 0.0
    %430 = vmatpush1.msra.mxu0 %v149
    %431 = vmatprep.subr.mxu0 0.0
    %432 = vmatpush1.msra.mxu0 %v150
    %433 = vmatprep.subr.mxu0 0.0
    %434 = vmatpush1.msra.mxu0 %v151
    %435 = vmatprep.subr.mxu0 0.0
    %436 = vmatpush1.msra.mxu0 %v152
    %437 = vmatprep.subr.mxu0 0.0
    %438 = vmatpush1.msra.mxu0 %v153
    %439 = vmatprep.subr.mxu0 0.0
    %440 = vmatpush1.msra.mxu0 %v154
    %441 = vmatprep.subr.mxu0 0.0
    %442 = vmatpush1.msra.mxu0 %v155
    %443 = vmatprep.mubr.f32.mxu0 %v229
    %444 = vmatmul.mubr.f32.gmra.mrb[0].mxu0 %v221
    %v445 = vpop.f32.mrb[0].mxu0
    %v446 = vadd.f32 %v376, %v445
    %v447 = vpop.f32.mrb[0].mxu0
    %448 = vdwg.mxu0
    %449 = vmatprep.subr.mxu0 0.0
    %450 = vmatpush1.msra.mxu0 %v156
    %451 = vmatprep.subr.mxu0 0.0
    %452 = vmatpush1.msra.mxu0 %v157
    %453 = vmatprep.subr.mxu0 0.0
    %454 = vmatpush1.msra.mxu0 %v158
    %455 = vmatprep.subr.mxu0 0.0
    %456 = vmatpush1.msra.mxu0 %v159
    %457 = vmatprep.subr.mxu0 0.0
    %458 = vmatpush1.msra.mxu0 %v160
    %459 = vmatprep.subr.mxu0 0.0
    %460 = vmatpush1.msra.mxu0 %v161
    %461 = vmatprep.subr.mxu0 0.0
    %462 = vmatpush1.msra.mxu0 %v162
    %463 = vmatprep.subr.mxu0 0.0
    %464 = vmatpush1.msra.mxu0 %v163
    %465 = vmatprep.subr.mxu0 0.0
    %466 = vmatpush1.msra.mxu0 %v164
    %467 = vmatprep.subr.mxu0 0.0
    %468 = vmatpush1.msra.mxu0 %v165
    %469 = vmatprep.subr.mxu0 0.0
    %470 = vmatpush1.msra.mxu0 %v166
    %471 = vmatprep.subr.mxu0 0.0
    %472 = vmatpush1.msra.mxu0 %v167
    %473 = vmatprep.subr.mxu0 0.0
    %474 = vmatpush1.msra.mxu0 %v168
    %475 = vmatprep.subr.mxu0 0.0
    %476 = vmatpush1.msra.mxu0 %v169
    %477 = vmatprep.subr.mxu0 0.0
    %478 = vmatpush1.msra.mxu0 %v170
    %479 = vmatprep.subr.mxu0 0.0
    %480 = vmatpush1.msra.mxu0 %v171
    %481 = vmatprep.subr.mxu0 0.0
    %482 = vmatpush1.msra.mxu0 %v172
    %483 = vmatprep.subr.mxu0 0.0
    %484 = vmatpush1.msra.mxu0 %v173
    %485 = vmatprep.subr.mxu0 0.0
    %486 = vmatpush1.msra.mxu0 %v174
    %487 = vmatprep.subr.mxu0 0.0
    %488 = vmatpush1.msra.mxu0 %v175
    %489 = vmatprep.subr.mxu0 0.0
    %490 = vmatpush1.msra.mxu0 %v176
    %491 = vmatprep.subr.mxu0 0.0
    %492 = vmatpush1.msra.mxu0 %v177
    %493 = vmatprep.subr.mxu0 0.0
    %494 = vmatpush1.msra.mxu0 %v178
    %495 = vmatprep.subr.mxu0 0.0
    %496 = vmatpush1.msra.mxu0 %v179
    %497 = vmatprep.subr.mxu0 0.0
    %498 = vmatpush1.msra.mxu0 %v180
    %499 = vmatprep.subr.mxu0 0.0
    %500 = vmatpush1.msra.mxu0 %v181
    %501 = vmatprep.subr.mxu0 0.0
    %502 = vmatpush1.msra.mxu0 %v182
    %503 = vmatprep.subr.mxu0 0.0
    %504 = vmatpush1.msra.mxu0 %v183
    %505 = vmatprep.subr.mxu0 0.0
    %506 = vmatpush1.msra.mxu0 %v184
    %507 = vmatprep.subr.mxu0 0.0
    %508 = vmatpush1.msra.mxu0 %v185
    %509 = vmatprep.subr.mxu0 0.0
    %510 = vmatpush1.msra.mxu0 %v186
    %511 = vmatprep.subr.mxu0 0.0
    %512 = vmatpush1.msra.mxu0 %v187
    %513 = vmatprep.mubr.f32.mxu0 %v230
    %514 = vmatmul.mubr.f32.gmra.mrb[0].mxu0 %v228
    %v515 = vpop.f32.mrb[0].mxu0
    %v516 = vadd.f32 %v446, %v515
    %v517 = vpop.f32.mrb[0].mxu0
    %518 = vdwg.mxu0
    %v519 = vmax.f32 %v516, 0.0
    %v520 = vld [vmem:[%s4] sm:$0xff]
    %v521 = vld [vmem:[%s4 + $0x8] sm:$0xff]
    %v522 = vld [vmem:[%s4 + $0x10] sm:$0xff]
    %v523 = vld [vmem:[%s4 + $0x18] sm:$0xff]
    %v524 = vld [vmem:[%s5] sm:$0x1]
    %v526 = vlaneseq
    %v527 = vshrl.u32 %v526, 7
    %v528 = vsub.s32 0, %v527
    %v529 = vrot.slane %v524, %v528
    %vm531 = vcmask 261120
    %v533 = vsel %vm531, %v519, 0
    %535 = vmatprep.subr.mxu0 0.0
    %536 = vmatpush1.msra.mxu0 %v520
    %537 = vmatprep.subr.mxu0 0.0
    %538 = vmatpush1.msra.mxu0 %v521
    %539 = vmatprep.subr.mxu0 0.0
    %540 = vmatpush1.msra.mxu0 %v522
    %541 = vmatprep.subr.mxu0 0.0
    %542 = vmatpush1.msra.mxu0 %v523
    %543 = vmatprep.subr.mxu0 0.0
    %544 = vmatpush1.msra.mxu0 0.0
    %545 = vmatprep.subr.mxu0 0.0
    %546 = vmatpush1.msra.mxu0 0.0
    %547 = vmatprep.subr.mxu0 0.0
    %548 = vmatpush1.msra.mxu0 0.0
    %549 = vmatprep.subr.mxu0 0.0
    %550 = vmatpush1.msra.mxu0 0.0
    %551 = vmatprep.subr.mxu0 0.0
    %552 = vmatpush1.msra.mxu0 0.0
    %553 = vmatprep.subr.mxu0 0.0
    %554 = vmatpush1.msra.mxu0 0.0
    %555 = vmatprep.subr.mxu0 0.0
    %556 = vmatpush1.msra.mxu0 0.0
    %557 = vmatprep.subr.mxu0 0.0
    %558 = vmatpush1.msra.mxu0 0.0
    %559 = vmatprep.subr.mxu0 0.0
    %560 = vmatpush1.msra.mxu0 0.0
    %561 = vmatprep.subr.mxu0 0.0
    %562 = vmatpush1.msra.mxu0 0.0
    %563 = vmatprep.subr.mxu0 0.0
    %564 = vmatpush1.msra.mxu0 0.0
    %565 = vmatprep.subr.mxu0 0.0
    %566 = vmatpush1.msra.mxu0 0.0
    %567 = vmatprep.subr.mxu0 0.0
    %568 = vmatpush1.msra.mxu0 0.0
    %569 = vmatprep.subr.mxu0 0.0
    %570 = vmatpush1.msra.mxu0 0.0
    %571 = vmatprep.subr.mxu0 0.0
    %572 = vmatpush1.msra.mxu0 0.0
    %573 = vmatprep.subr.mxu0 0.0
    %574 = vmatpush1.msra.mxu0 0.0
    %575 = vmatprep.subr.mxu0 0.0
    %576 = vmatpush1.msra.mxu0 0.0
    %577 = vmatprep.subr.mxu0 0.0
    %578 = vmatpush1.msra.mxu0 0.0
    %579 = vmatprep.subr.mxu0 0.0
    %580 = vmatpush1.msra.mxu0 0.0
    %581 = vmatprep.subr.mxu0 0.0
    %582 = vmatpush1.msra.mxu0 0.0
    %583 = vmatprep.subr.mxu0 0.0
    %584 = vmatpush1.msra.mxu0 0.0
    %585 = vmatprep.subr.mxu0 0.0
    %586 = vmatpush1.msra.mxu0 0.0
    %587 = vmatprep.subr.mxu0 0.0
    %588 = vmatpush1.msra.mxu0 0.0
    %589 = vmatprep.subr.mxu0 0.0
    %590 = vmatpush1.msra.mxu0 0.0
    %591 = vmatprep.subr.mxu0 0.0
    %592 = vmatpush1.msra.mxu0 0.0
    %593 = vmatprep.subr.mxu0 0.0
    %594 = vmatpush1.msra.mxu0 0.0
    %595 = vmatprep.subr.mxu0 0.0
    %596 = vmatpush1.msra.mxu0 0.0
    %597 = vmatprep.subr.mxu0 0.0
    %598 = vmatpush1.msra.mxu0 0.0
    %599 = vmatprep.mubr.f32.mxu0 0.0
    %600 = vmatmul.mubr.f32.gmra.mrb[0].mxu0 %v533
    %v601 = vpop.f32.mrb[0].mxu0
    %v602 = vadd.f32 %v529, %v601
    %v603 = vpop.f32.mrb[0].mxu0
    %604 = vdwg.mxu0
    %v605 = vmax.f32 %v602, 0.0
    %v606 = vld [vmem:[%s6] sm:$0xff]
    %v607 = vld [vmem:[%s6 + $0x8] sm:$0xff]
    %v608 = vld [vmem:[%s6 + $0x10] sm:$0xff]
    %v609 = vld [vmem:[%s6 + $0x18] sm:$0xff]
    %v610 = vld [vmem:[%s7] sm:$0x1]
    %v612 = vlaneseq
    %v613 = vshrl.u32 %v612, 7
    %v614 = vsub.s32 0, %v613
    %v615 = vrot.slane %v610, %v614
    %v618 = vsel %vm531, %v605, 0
    %620 = vmatprep.subr.mxu0 0.0
    %621 = vmatpush1.msra.mxu0 %v606
    %622 = vmatprep.subr.mxu0 0.0
    %623 = vmatpush1.msra.mxu0 %v607
    %624 = vmatprep.subr.mxu0 0.0
    %625 = vmatpush1.msra.mxu0 %v608
    %626 = vmatprep.subr.mxu0 0.0
    %627 = vmatpush1.msra.mxu0 %v609
    %628 = vmatprep.subr.mxu0 0.0
    %629 = vmatpush1.msra.mxu0 0.0
    %630 = vmatprep.subr.mxu0 0.0
    %631 = vmatpush1.msra.mxu0 0.0
    %632 = vmatprep.subr.mxu0 0.0
    %633 = vmatpush1.msra.mxu0 0.0
    %634 = vmatprep.subr.mxu0 0.0
    %635 = vmatpush1.msra.mxu0 0.0
    %636 = vmatprep.subr.mxu0 0.0
    %637 = vmatpush1.msra.mxu0 0.0
    %638 = vmatprep.subr.mxu0 0.0
    %639 = vmatpush1.msra.mxu0 0.0
    %640 = vmatprep.subr.mxu0 0.0
    %641 = vmatpush1.msra.mxu0 0.0
    %642 = vmatprep.subr.mxu0 0.0
    %643 = vmatpush1.msra.mxu0 0.0
    %644 = vmatprep.subr.mxu0 0.0
    %645 = vmatpush1.msra.mxu0 0.0
    %646 = vmatprep.subr.mxu0 0.0
    %647 = vmatpush1.msra.mxu0 0.0
    %648 = vmatprep.subr.mxu0 0.0
    %649 = vmatpush1.msra.mxu0 0.0
    %650 = vmatprep.subr.mxu0 0.0
    %651 = vmatpush1.msra.mxu0 0.0
    %652 = vmatprep.subr.mxu0 0.0
    %653 = vmatpush1.msra.mxu0 0.0
    %654 = vmatprep.subr.mxu0 0.0
    %655 = vmatpush1.msra.mxu0 0.0
    %656 = vmatprep.subr.mxu0 0.0
    %657 = vmatpush1.msra.mxu0 0.0
    %658 = vmatprep.subr.mxu0 0.0
    %659 = vmatpush1.msra.mxu0 0.0
    %660 = vmatprep.subr.mxu0 0.0
    %661 = vmatpush1.msra.mxu0 0.0
    %662 = vmatprep.subr.mxu0 0.0
    %663 = vmatpush1.msra.mxu0 0.0
    %664 = vmatprep.subr.mxu0 0.0
    %665 = vmatpush1.msra.mxu0 0.0
    %666 = vmatprep.subr.mxu0 0.0
    %667 = vmatpush1.msra.mxu0 0.0
    %668 = vmatprep.subr.mxu0 0.0
    %669 = vmatpush1.msra.mxu0 0.0
    %670 = vmatprep.subr.mxu0 0.0
    %671 = vmatpush1.msra.mxu0 0.0
    %672 = vmatprep.subr.mxu0 0.0
    %673 = vmatpush1.msra.mxu0 0.0
    %674 = vmatprep.subr.mxu0 0.0
    %675 = vmatpush1.msra.mxu0 0.0
    %676 = vmatprep.subr.mxu0 0.0
    %677 = vmatpush1.msra.mxu0 0.0
    %678 = vmatprep.subr.mxu0 0.0
    %679 = vmatpush1.msra.mxu0 0.0
    %680 = vmatprep.subr.mxu0 0.0
    %681 = vmatpush1.msra.mxu0 0.0
    %682 = vmatprep.subr.mxu0 0.0
    %683 = vmatpush1.msra.mxu0 0.0
    %684 = vmatprep.mubr.f32.mxu0 0.0
    %685 = vmatmul.mubr.f32.gmra.mrb[0].mxu0 %v618
    %v686 = vpop.f32.mrb[0].mxu0
    %v687 = vadd.f32 %v615, %v686
    %v688 = vpop.f32.mrb[0].mxu0
    %689 = vdwg.mxu0
    %v690 = vld [vmem:[%s8] sm:$0xff]
    %v691 = vld [vmem:[%s8 + $0x8] sm:$0xff]
    %v692 = vld [vmem:[%s8 + $0x10] sm:$0xff]
    %v693 = vld [vmem:[%s8 + $0x18] sm:$0xff]
    %v694 = vld [vmem:[%s9] sm:$0x1]
    %v696 = vlaneseq
    %v697 = vshrl.u32 %v696, 7
    %v698 = vsub.s32 0, %v697
    %v699 = vrot.slane %v694, %v698
    %701 = vmatprep.subr.mxu0 0.0
    %702 = vmatpush1.msra.mxu0 %v690
    %703 = vmatprep.subr.mxu0 0.0
    %704 = vmatpush1.msra.mxu0 %v691
    %705 = vmatprep.subr.mxu0 0.0
    %706 = vmatpush1.msra.mxu0 %v692
    %707 = vmatprep.subr.mxu0 0.0
    %708 = vmatpush1.msra.mxu0 %v693
    %709 = vmatprep.subr.mxu0 0.0
    %710 = vmatpush1.msra.mxu0 0.0
    %711 = vmatprep.subr.mxu0 0.0
    %712 = vmatpush1.msra.mxu0 0.0
    %713 = vmatprep.subr.mxu0 0.0
    %714 = vmatpush1.msra.mxu0 0.0
    %715 = vmatprep.subr.mxu0 0.0
    %716 = vmatpush1.msra.mxu0 0.0
    %717 = vmatprep.subr.mxu0 0.0
    %718 = vmatpush1.msra.mxu0 0.0
    %719 = vmatprep.subr.mxu0 0.0
    %720 = vmatpush1.msra.mxu0 0.0
    %721 = vmatprep.subr.mxu0 0.0
    %722 = vmatpush1.msra.mxu0 0.0
    %723 = vmatprep.subr.mxu0 0.0
    %724 = vmatpush1.msra.mxu0 0.0
    %725 = vmatprep.subr.mxu0 0.0
    %726 = vmatpush1.msra.mxu0 0.0
    %727 = vmatprep.subr.mxu0 0.0
    %728 = vmatpush1.msra.mxu0 0.0
    %729 = vmatprep.subr.mxu0 0.0
    %730 = vmatpush1.msra.mxu0 0.0
    %731 = vmatprep.subr.mxu0 0.0
    %732 = vmatpush1.msra.mxu0 0.0
    %733 = vmatprep.subr.mxu0 0.0
    %734 = vmatpush1.msra.mxu0 0.0
    %735 = vmatprep.subr.mxu0 0.0
    %736 = vmatpush1.msra.mxu0 0.0
    %737 = vmatprep.subr.mxu0 0.0
    %738 = vmatpush1.msra.mxu0 0.0
    %739 = vmatprep.subr.mxu0 0.0
    %740 = vmatpush1.msra.mxu0 0.0
    %741 = vmatprep.subr.mxu0 0.0
    %742 = vmatpush1.msra.mxu0 0.0
    %743 = vmatprep.subr.mxu0 0.0
    %744 = vmatpush1.msra.mxu0 0.0
    %745 = vmatprep.subr.mxu0 0.0
    %746 = vmatpush1.msra.mxu0 0.0
    %747 = vmatprep.subr.mxu0 0.0
    %748 = vmatpush1.msra.mxu0 0.0
    %749 = vmatprep.subr.mxu0 0.0
    %750 = vmatpush1.msra.mxu0 0.0
    %751 = vmatprep.subr.mxu0 0.0
    %752 = vmatpush1.msra.mxu0 0.0
    %753 = vmatprep.subr.mxu0 0.0
    %754 = vmatpush1.msra.mxu0 0.0
    %755 = vmatprep.subr.mxu0 0.0
    %756 = vmatpush1.msra.mxu0 0.0
    %757 = vmatprep.subr.mxu0 0.0
    %758 = vmatpush1.msra.mxu0 0.0
    %759 = vmatprep.subr.mxu0 0.0
    %760 = vmatpush1.msra.mxu0 0.0
    %761 = vmatprep.subr.mxu0 0.0
    %762 = vmatpush1.msra.mxu0 0.0
    %763 = vmatprep.subr.mxu0 0.0
    %764 = vmatpush1.msra.mxu0 0.0
    %765 = vmatprep.mubr.f32.mxu0 0.0
    %766 = vmatmul.mubr.f32.gmra.mrb[0].mxu0 %v618
    %v767 = vpop.f32.mrb[0].mxu0
    %v768 = vadd.f32 %v699, %v767
    %v769 = vpop.f32.mrb[0].mxu0
    %770 = vdwg.mxu0
    %v771 = vmul.f32 %v768, 1.442695
    %v772 = vpow.pop %v771
    %v773 = vmul.f32 %v772, 0.5
    %v774 = vld [vmem:[%s1] sm:$0x3]
    %v775 = vmul.f32 %v774, %v773
    %v776 = vadd.f32 %v687, %v775
    %v777 = vld [vmem:[%s10] sm:$0xff]
    %v778 = vld [vmem:[%s11] sm:$0x1]
    %v780 = vlaneseq
    %v781 = vshrl.u32 %v780, 7
    %v782 = vsub.s32 0, %v781
    %v783 = vrot.slane %v778, %v782
    %vm785 = vcmask 64512
    %v787 = vsel %vm785, %v776, 0
    %789 = vmatprep.subr.mxu0 0.0
    %790 = vmatpush1.msra.mxu0 %v777
    %791 = vmatprep.subr.mxu0 0.0
    %792 = vmatpush1.msra.mxu0 0.0
    %793 = vmatprep.subr.mxu0 0.0
    %794 = vmatpush1.msra.mxu0 0.0
    %795 = vmatprep.subr.mxu0 0.0
    %796 = vmatpush1.msra.mxu0 0.0
    %797 = vmatprep.subr.mxu0 0.0
    %798 = vmatpush1.msra.mxu0 0.0
    %799 = vmatprep.subr.mxu0 0.0
    %800 = vmatpush1.msra.mxu0 0.0
    %801 = vmatprep.subr.mxu0 0.0
    %802 = vmatpush1.msra.mxu0 0.0
    %803 = vmatprep.subr.mxu0 0.0
    %804 = vmatpush1.msra.mxu0 0.0
    %805 = vmatprep.subr.mxu0 0.0
    %806 = vmatpush1.msra.mxu0 0.0
    %807 = vmatprep.subr.mxu0 0.0
    %808 = vmatpush1.msra.mxu0 0.0
    %809 = vmatprep.subr.mxu0 0.0
    %810 = vmatpush1.msra.mxu0 0.0
    %811 = vmatprep.subr.mxu0 0.0
    %812 = vmatpush1.msra.mxu0 0.0
    %813 = vmatprep.subr.mxu0 0.0
    %814 = vmatpush1.msra.mxu0 0.0
    %815 = vmatprep.subr.mxu0 0.0
    %816 = vmatpush1.msra.mxu0 0.0
    %817 = vmatprep.subr.mxu0 0.0
    %818 = vmatpush1.msra.mxu0 0.0
    %819 = vmatprep.subr.mxu0 0.0
    %820 = vmatpush1.msra.mxu0 0.0
    %821 = vmatprep.subr.mxu0 0.0
    %822 = vmatpush1.msra.mxu0 0.0
    %823 = vmatprep.subr.mxu0 0.0
    %824 = vmatpush1.msra.mxu0 0.0
    %825 = vmatprep.subr.mxu0 0.0
    %826 = vmatpush1.msra.mxu0 0.0
    %827 = vmatprep.subr.mxu0 0.0
    %828 = vmatpush1.msra.mxu0 0.0
    %829 = vmatprep.subr.mxu0 0.0
    %830 = vmatpush1.msra.mxu0 0.0
    %831 = vmatprep.subr.mxu0 0.0
    %832 = vmatpush1.msra.mxu0 0.0
    %833 = vmatprep.subr.mxu0 0.0
    %834 = vmatpush1.msra.mxu0 0.0
    %835 = vmatprep.subr.mxu0 0.0
    %836 = vmatpush1.msra.mxu0 0.0
    %837 = vmatprep.subr.mxu0 0.0
    %838 = vmatpush1.msra.mxu0 0.0
    %839 = vmatprep.subr.mxu0 0.0
    %840 = vmatpush1.msra.mxu0 0.0
    %841 = vmatprep.subr.mxu0 0.0
    %842 = vmatpush1.msra.mxu0 0.0
    %843 = vmatprep.subr.mxu0 0.0
    %844 = vmatpush1.msra.mxu0 0.0
    %845 = vmatprep.subr.mxu0 0.0
    %846 = vmatpush1.msra.mxu0 0.0
    %847 = vmatprep.subr.mxu0 0.0
    %848 = vmatpush1.msra.mxu0 0.0
    %849 = vmatprep.subr.mxu0 0.0
    %850 = vmatpush1.msra.mxu0 0.0
    %851 = vmatprep.subr.mxu0 0.0
    %852 = vmatpush1.msra.mxu0 0.0
    %853 = vmatprep.mubr.f32.mxu0 0.0
    %854 = vmatmul.mubr.f32.gmra.mrb[0].mxu0 %v787
    %v855 = vpop.f32.mrb[0].mxu0
    %v856 = vadd.f32 %v783, %v855
    %v857 = vpop.f32.mrb[0].mxu0
    %858 = vdwg.mxu0
    %v859 = vmax.f32 %v856, 0.0
    %v860 = vld [vmem:[%s12] sm:$0xff]
    %v861 = vld [vmem:[%s12 + $0x8] sm:$0xff]
    %v862 = vld [vmem:[%s12 + $0x10] sm:$0xff]
    %v863 = vld [vmem:[%s12 + $0x18] sm:$0xff]
    %v864 = vld [vmem:[%s13] sm:$0x1]
    %v866 = vlaneseq
    %v867 = vshrl.u32 %v866, 7
    %v868 = vsub.s32 0, %v867
    %v869 = vrot.slane %v864, %v868
    %v872 = vsel %vm531, %v859, 0
    %874 = vmatprep.subr.mxu0 0.0
    %875 = vmatpush1.msra.mxu0 %v860
    %876 = vmatprep.subr.mxu0 0.0
    %877 = vmatpush1.msra.mxu0 %v861
    %878 = vmatprep.subr.mxu0 0.0
    %879 = vmatpush1.msra.mxu0 %v862
    %880 = vmatprep.subr.mxu0 0.0
    %881 = vmatpush1.msra.mxu0 %v863
    %882 = vmatprep.subr.mxu0 0.0
    %883 = vmatpush1.msra.mxu0 0.0
    %884 = vmatprep.subr.mxu0 0.0
    %885 = vmatpush1.msra.mxu0 0.0
    %886 = vmatprep.subr.mxu0 0.0
    %887 = vmatpush1.msra.mxu0 0.0
    %888 = vmatprep.subr.mxu0 0.0
    %889 = vmatpush1.msra.mxu0 0.0
    %890 = vmatprep.subr.mxu0 0.0
    %891 = vmatpush1.msra.mxu0 0.0
    %892 = vmatprep.subr.mxu0 0.0
    %893 = vmatpush1.msra.mxu0 0.0
    %894 = vmatprep.subr.mxu0 0.0
    %895 = vmatpush1.msra.mxu0 0.0
    %896 = vmatprep.subr.mxu0 0.0
    %897 = vmatpush1.msra.mxu0 0.0
    %898 = vmatprep.subr.mxu0 0.0
    %899 = vmatpush1.msra.mxu0 0.0
    %900 = vmatprep.subr.mxu0 0.0
    %901 = vmatpush1.msra.mxu0 0.0
    %902 = vmatprep.subr.mxu0 0.0
    %903 = vmatpush1.msra.mxu0 0.0
    %904 = vmatprep.subr.mxu0 0.0
    %905 = vmatpush1.msra.mxu0 0.0
    %906 = vmatprep.subr.mxu0 0.0
    %907 = vmatpush1.msra.mxu0 0.0
    %908 = vmatprep.subr.mxu0 0.0
    %909 = vmatpush1.msra.mxu0 0.0
    %910 = vmatprep.subr.mxu0 0.0
    %911 = vmatpush1.msra.mxu0 0.0
    %912 = vmatprep.subr.mxu0 0.0
    %913 = vmatpush1.msra.mxu0 0.0
    %914 = vmatprep.subr.mxu0 0.0
    %915 = vmatpush1.msra.mxu0 0.0
    %916 = vmatprep.subr.mxu0 0.0
    %917 = vmatpush1.msra.mxu0 0.0
    %918 = vmatprep.subr.mxu0 0.0
    %919 = vmatpush1.msra.mxu0 0.0
    %920 = vmatprep.subr.mxu0 0.0
    %921 = vmatpush1.msra.mxu0 0.0
    %922 = vmatprep.subr.mxu0 0.0
    %923 = vmatpush1.msra.mxu0 0.0
    %924 = vmatprep.subr.mxu0 0.0
    %925 = vmatpush1.msra.mxu0 0.0
    %926 = vmatprep.subr.mxu0 0.0
    %927 = vmatpush1.msra.mxu0 0.0
    %928 = vmatprep.subr.mxu0 0.0
    %929 = vmatpush1.msra.mxu0 0.0
    %930 = vmatprep.subr.mxu0 0.0
    %931 = vmatpush1.msra.mxu0 0.0
    %932 = vmatprep.subr.mxu0 0.0
    %933 = vmatpush1.msra.mxu0 0.0
    %934 = vmatprep.subr.mxu0 0.0
    %935 = vmatpush1.msra.mxu0 0.0
    %936 = vmatprep.subr.mxu0 0.0
    %937 = vmatpush1.msra.mxu0 0.0
    %938 = vmatprep.mubr.f32.mxu0 0.0
    %939 = vmatmul.mubr.f32.gmra.mrb[0].mxu0 %v872
    %v940 = vpop.f32.mrb[0].mxu0
    %v941 = vadd.f32 %v869, %v940
    %v942 = vpop.f32.mrb[0].mxu0
    %943 = vdwg.mxu0
    %v944 = vmax.f32 %v941, 0.0
    %v945 = vld [vmem:[%s14] sm:$0xff]
    %v946 = vld [vmem:[%s14 + $0x8] sm:$0xff]
    %v947 = vld [vmem:[%s14 + $0x10] sm:$0xff]
    %v948 = vld [vmem:[%s14 + $0x18] sm:$0xff]
    %v949 = vld [vmem:[%s14 + $0x20] sm:$0xff]
    %v950 = vld [vmem:[%s14 + $0x28] sm:$0xff]
    %v951 = vld [vmem:[%s14 + $0x30] sm:$0xff]
    %v952 = vld [vmem:[%s14 + $0x38] sm:$0xff]
    %v953 = vld [vmem:[%s14 + $0x40] sm:$0xff]
    %v954 = vld [vmem:[%s14 + $0x48] sm:$0xff]
    %v955 = vld [vmem:[%s14 + $0x50] sm:$0xff]
    %v956 = vld [vmem:[%s14 + $0x58] sm:$0xff]
    %v957 = vld [vmem:[%s14 + $0x60] sm:$0xff]
    %v958 = vld [vmem:[%s14 + $0x68] sm:$0xff]
    %v959 = vld [vmem:[%s14 + $0x70] sm:$0xff]
    %v960 = vld [vmem:[%s14 + $0x78] sm:$0xff]
    %v961 = vld [vmem:[%s14 + $0x80] sm:$0xff]
    %v962 = vld [vmem:[%s14 + $0x88] sm:$0xff]
    %v963 = vld [vmem:[%s14 + $0x90] sm:$0xff]
    %v964 = vld [vmem:[%s14 + $0x98] sm:$0xff]
    %v965 = vld [vmem:[%s14 + $0xa0] sm:$0xff]
    %v966 = vld [vmem:[%s14 + $0xa8] sm:$0xff]
    %v967 = vld [vmem:[%s14 + $0xb0] sm:$0xff]
    %v968 = vld [vmem:[%s14 + $0xb8] sm:$0xff]
    %v969 = vld [vmem:[%s14 + $0xc0] sm:$0xff]
    %v970 = vld [vmem:[%s14 + $0xc8] sm:$0xff]
    %v971 = vld [vmem:[%s14 + $0xd0] sm:$0xff]
    %v972 = vld [vmem:[%s14 + $0xd8] sm:$0xff]
    %v973 = vld [vmem:[%s14 + $0xe0] sm:$0xff]
    %v974 = vld [vmem:[%s14 + $0xe8] sm:$0xff]
    %v975 = vld [vmem:[%s14 + $0xf0] sm:$0xff]
    %v976 = vld [vmem:[%s14 + $0xf8] sm:$0xff]
    %v977 = vld [vmem:[%s15] sm:$0xff]
    %v979 = vlaneseq
    %v980 = vshrl.u32 %v979, 7
    %v981 = vsub.s32 0, %v980
    %v982 = vrot.slane %v977, %v981
    %v983 = vlaneseq
    %v984 = vshrl.u32 %v983, 7
    %v985 = vsub.s32 1, %v984
    %v986 = vrot.slane %v977, %v985
    %v987 = vlaneseq
    %v988 = vshrl.u32 %v987, 7
    %v989 = vsub.s32 2, %v988
    %v990 = vrot.slane %v977, %v989
    %v991 = vlaneseq
    %v992 = vshrl.u32 %v991, 7
    %v993 = vsub.s32 3, %v992
    %v994 = vrot.slane %v977, %v993
    %v995 = vlaneseq
    %v996 = vshrl.u32 %v995, 7
    %v997 = vsub.s32 4, %v996
    %v998 = vrot.slane %v977, %v997
    %v999 = vlaneseq
    %v1000 = vshrl.u32 %v999, 7
    %v1001 = vsub.s32 5, %v1000
    %v1002 = vrot.slane %v977, %v1001
    %v1003 = vlaneseq
    %v1004 = vshrl.u32 %v1003, 7
    %v1005 = vsub.s32 6, %v1004
    %v1006 = vrot.slane %v977, %v1005
    %v1007 = vlaneseq
    %v1008 = vshrl.u32 %v1007, 7
    %v1009 = vsub.s32 7, %v1008
    %v1010 = vrot.slane %v977, %v1009
    %v1020 = vsel %vm531, %v944, 0
    %1022 = vmatprep.subr.mxu0 %v946
    %1023 = vmatpush1.msra.mxu0 %v945
    %1024 = vmatprep.subr.mxu0 %v954
    %1025 = vmatpush1.msra.mxu0 %v953
    %1026 = vmatprep.subr.mxu0 %v962
    %1027 = vmatpush1.msra.mxu0 %v961
    %1028 = vmatprep.subr.mxu0 %v970
    %1029 = vmatpush1.msra.mxu0 %v969
    %1030 = vmatprep.subr.mxu0 0.0
    %1031 = vmatpush1.msra.mxu0 0.0
    %1032 = vmatprep.subr.mxu0 0.0
    %1033 = vmatpush1.msra.mxu0 0.0
    %1034 = vmatprep.subr.mxu0 0.0
    %1035 = vmatpush1.msra.mxu0 0.0
    %1036 = vmatprep.subr.mxu0 0.0
    %1037 = vmatpush1.msra.mxu0 0.0
    %1038 = vmatprep.subr.mxu0 0.0
    %1039 = vmatpush1.msra.mxu0 0.0
    %1040 = vmatprep.subr.mxu0 0.0
    %1041 = vmatpush1.msra.mxu0 0.0
    %1042 = vmatprep.subr.mxu0 0.0
    %1043 = vmatpush1.msra.mxu0 0.0
    %1044 = vmatprep.subr.mxu0 0.0
    %1045 = vmatpush1.msra.mxu0 0.0
    %1046 = vmatprep.subr.mxu0 0.0
    %1047 = vmatpush1.msra.mxu0 0.0
    %1048 = vmatprep.subr.mxu0 0.0
    %1049 = vmatpush1.msra.mxu0 0.0
    %1050 = vmatprep.subr.mxu0 0.0
    %1051 = vmatpush1.msra.mxu0 0.0
    %1052 = vmatprep.subr.mxu0 0.0
    %1053 = vmatpush1.msra.mxu0 0.0
    %1054 = vmatprep.subr.mxu0 0.0
    %1055 = vmatpush1.msra.mxu0 0.0
    %1056 = vmatprep.subr.mxu0 0.0
    %1057 = vmatpush1.msra.mxu0 0.0
    %1058 = vmatprep.subr.mxu0 0.0
    %1059 = vmatpush1.msra.mxu0 0.0
    %1060 = vmatprep.subr.mxu0 0.0
    %1061 = vmatpush1.msra.mxu0 0.0
    %1062 = vmatprep.subr.mxu0 0.0
    %1063 = vmatpush1.msra.mxu0 0.0
    %1064 = vmatprep.subr.mxu0 0.0
    %1065 = vmatpush1.msra.mxu0 0.0
    %1066 = vmatprep.subr.mxu0 0.0
    %1067 = vmatpush1.msra.mxu0 0.0
    %1068 = vmatprep.subr.mxu0 0.0
    %1069 = vmatpush1.msra.mxu0 0.0
    %1070 = vmatprep.subr.mxu0 0.0
    %1071 = vmatpush1.msra.mxu0 0.0
    %1072 = vmatprep.subr.mxu0 0.0
    %1073 = vmatpush1.msra.mxu0 0.0
    %1074 = vmatprep.subr.mxu0 0.0
    %1075 = vmatpush1.msra.mxu0 0.0
    %1076 = vmatprep.subr.mxu0 0.0
    %1077 = vmatpush1.msra.mxu0 0.0
    %1078 = vmatprep.subr.mxu0 0.0
    %1079 = vmatpush1.msra.mxu0 0.0
    %1080 = vmatprep.subr.mxu0 0.0
    %1081 = vmatpush1.msra.mxu0 0.0
    %1082 = vmatprep.subr.mxu0 0.0
    %1083 = vmatpush1.msra.mxu0 0.0
    %1084 = vmatprep.subr.mxu0 0.0
    %1085 = vmatpush1.msra.mxu0 0.0
    %1086 = vmatprep.mubr.f32.mxu0 0.0
    %1087 = vmatmul.mubr.f32.gmra.mrb[0].mxu0 %v1020
    %v1088 = vpop.f32.mrb[0].mxu0
    %v1089 = vadd.f32 %v982, %v1088
    %v1090 = vpop.f32.mrb[0].mxu0
    %v1091 = vadd.f32 %v986, %v1090
    %1092 = vdwg.mxu0
    %1093 = vmatprep.subr.mxu0 %v948
    %1094 = vmatpush1.msra.mxu0 %v947
    %1095 = vmatprep.subr.mxu0 %v956
    %1096 = vmatpush1.msra.mxu0 %v955
    %1097 = vmatprep.subr.mxu0 %v964
    %1098 = vmatpush1.msra.mxu0 %v963
    %1099 = vmatprep.subr.mxu0 %v972
    %1100 = vmatpush1.msra.mxu0 %v971
    %1101 = vmatprep.subr.mxu0 0.0
    %1102 = vmatpush1.msra.mxu0 0.0
    %1103 = vmatprep.subr.mxu0 0.0
    %1104 = vmatpush1.msra.mxu0 0.0
    %1105 = vmatprep.subr.mxu0 0.0
    %1106 = vmatpush1.msra.mxu0 0.0
    %1107 = vmatprep.subr.mxu0 0.0
    %1108 = vmatpush1.msra.mxu0 0.0
    %1109 = vmatprep.subr.mxu0 0.0
    %1110 = vmatpush1.msra.mxu0 0.0
    %1111 = vmatprep.subr.mxu0 0.0
    %1112 = vmatpush1.msra.mxu0 0.0
    %1113 = vmatprep.subr.mxu0 0.0
    %1114 = vmatpush1.msra.mxu0 0.0
    %1115 = vmatprep.subr.mxu0 0.0
    %1116 = vmatpush1.msra.mxu0 0.0
    %1117 = vmatprep.subr.mxu0 0.0
    %1118 = vmatpush1.msra.mxu0 0.0
    %1119 = vmatprep.subr.mxu0 0.0
    %1120 = vmatpush1.msra.mxu0 0.0
    %1121 = vmatprep.subr.mxu0 0.0
    %1122 = vmatpush1.msra.mxu0 0.0
    %1123 = vmatprep.subr.mxu0 0.0
    %1124 = vmatpush1.msra.mxu0 0.0
    %1125 = vmatprep.subr.mxu0 0.0
    %1126 = vmatpush1.msra.mxu0 0.0
    %1127 = vmatprep.subr.mxu0 0.0
    %1128 = vmatpush1.msra.mxu0 0.0
    %1129 = vmatprep.subr.mxu0 0.0
    %1130 = vmatpush1.msra.mxu0 0.0
    %1131 = vmatprep.subr.mxu0 0.0
    %1132 = vmatpush1.msra.mxu0 0.0
    %1133 = vmatprep.subr.mxu0 0.0
    %1134 = vmatpush1.msra.mxu0 0.0
    %1135 = vmatprep.subr.mxu0 0.0
    %1136 = vmatpush1.msra.mxu0 0.0
    %1137 = vmatprep.subr.mxu0 0.0
    %1138 = vmatpush1.msra.mxu0 0.0
    %1139 = vmatprep.subr.mxu0 0.0
    %1140 = vmatpush1.msra.mxu0 0.0
    %1141 = vmatprep.subr.mxu0 0.0
    %1142 = vmatpush1.msra.mxu0 0.0
    %1143 = vmatprep.subr.mxu0 0.0
    %1144 = vmatpush1.msra.mxu0 0.0
    %1145 = vmatprep.subr.mxu0 0.0
    %1146 = vmatpush1.msra.mxu0 0.0
    %1147 = vmatprep.subr.mxu0 0.0
    %1148 = vmatpush1.msra.mxu0 0.0
    %1149 = vmatprep.subr.mxu0 0.0
    %1150 = vmatpush1.msra.mxu0 0.0
    %1151 = vmatprep.subr.mxu0 0.0
    %1152 = vmatpush1.msra.mxu0 0.0
    %1153 = vmatprep.subr.mxu0 0.0
    %1154 = vmatpush1.msra.mxu0 0.0
    %1155 = vmatprep.subr.mxu0 0.0
    %1156 = vmatpush1.msra.mxu0 0.0
    %1157 = vmatprep.mubr.f32.mxu0 0.0
    %1158 = vmatmul.mubr.f32.gmra.mrb[0].mxu0 %v1020
    %v1159 = vpop.f32.mrb[0].mxu0
    %v1160 = vadd.f32 %v990, %v1159
    %v1161 = vpop.f32.mrb[0].mxu0
    %v1162 = vadd.f32 %v994, %v1161
    %1163 = vdwg.mxu0
    %1164 = vmatprep.subr.mxu0 %v950
    %1165 = vmatpush1.msra.mxu0 %v949
    %1166 = vmatprep.subr.mxu0 %v958
    %1167 = vmatpush1.msra.mxu0 %v957
    %1168 = vmatprep.subr.mxu0 %v966
    %1169 = vmatpush1.msra.mxu0 %v965
    %1170 = vmatprep.subr.mxu0 %v974
    %1171 = vmatpush1.msra.mxu0 %v973
    %1172 = vmatprep.subr.mxu0 0.0
    %1173 = vmatpush1.msra.mxu0 0.0
    %1174 = vmatprep.subr.mxu0 0.0
    %1175 = vmatpush1.msra.mxu0 0.0
    %1176 = vmatprep.subr.mxu0 0.0
    %1177 = vmatpush1.msra.mxu0 0.0
    %1178 = vmatprep.subr.mxu0 0.0
    %1179 = vmatpush1.msra.mxu0 0.0
    %1180 = vmatprep.subr.mxu0 0.0
    %1181 = vmatpush1.msra.mxu0 0.0
    %1182 = vmatprep.subr.mxu0 0.0
    %1183 = vmatpush1.msra.mxu0 0.0
    %1184 = vmatprep.subr.mxu0 0.0
    %1185 = vmatpush1.msra.mxu0 0.0
    %1186 = vmatprep.subr.mxu0 0.0
    %1187 = vmatpush1.msra.mxu0 0.0
    %1188 = vmatprep.subr.mxu0 0.0
    %1189 = vmatpush1.msra.mxu0 0.0
    %1190 = vmatprep.subr.mxu0 0.0
    %1191 = vmatpush1.msra.mxu0 0.0
    %1192 = vmatprep.subr.mxu0 0.0
    %1193 = vmatpush1.msra.mxu0 0.0
    %1194 = vmatprep.subr.mxu0 0.0
    %1195 = vmatpush1.msra.mxu0 0.0
    %1196 = vmatprep.subr.mxu0 0.0
    %1197 = vmatpush1.msra.mxu0 0.0
    %1198 = vmatprep.subr.mxu0 0.0
    %1199 = vmatpush1.msra.mxu0 0.0
    %1200 = vmatprep.subr.mxu0 0.0
    %1201 = vmatpush1.msra.mxu0 0.0
    %1202 = vmatprep.subr.mxu0 0.0
    %1203 = vmatpush1.msra.mxu0 0.0
    %1204 = vmatprep.subr.mxu0 0.0
    %1205 = vmatpush1.msra.mxu0 0.0
    %1206 = vmatprep.subr.mxu0 0.0
    %1207 = vmatpush1.msra.mxu0 0.0
    %1208 = vmatprep.subr.mxu0 0.0
    %1209 = vmatpush1.msra.mxu0 0.0
    %1210 = vmatprep.subr.mxu0 0.0
    %1211 = vmatpush1.msra.mxu0 0.0
    %1212 = vmatprep.subr.mxu0 0.0
    %1213 = vmatpush1.msra.mxu0 0.0
    %1214 = vmatprep.subr.mxu0 0.0
    %1215 = vmatpush1.msra.mxu0 0.0
    %1216 = vmatprep.subr.mxu0 0.0
    %1217 = vmatpush1.msra.mxu0 0.0
    %1218 = vmatprep.subr.mxu0 0.0
    %1219 = vmatpush1.msra.mxu0 0.0
    %1220 = vmatprep.subr.mxu0 0.0
    %1221 = vmatpush1.msra.mxu0 0.0
    %1222 = vmatprep.subr.mxu0 0.0
    %1223 = vmatpush1.msra.mxu0 0.0
    %1224 = vmatprep.subr.mxu0 0.0
    %1225 = vmatpush1.msra.mxu0 0.0
    %1226 = vmatprep.subr.mxu0 0.0
    %1227 = vmatpush1.msra.mxu0 0.0
    %1228 = vmatprep.mubr.f32.mxu0 0.0
    %1229 = vmatmul.mubr.f32.gmra.mrb[0].mxu0 %v1020
    %v1230 = vpop.f32.mrb[0].mxu0
    %v1231 = vadd.f32 %v998, %v1230
    %v1232 = vpop.f32.mrb[0].mxu0
    %v1233 = vadd.f32 %v1002, %v1232
    %1234 = vdwg.mxu0
    %1235 = vmatprep.subr.mxu0 %v952
    %1236 = vmatpush1.msra.mxu0 %v951
    %1237 = vmatprep.subr.mxu0 %v960
    %1238 = vmatpush1.msra.mxu0 %v959
    %1239 = vmatprep.subr.mxu0 %v968
    %1240 = vmatpush1.msra.mxu0 %v967
    %1241 = vmatprep.subr.mxu0 %v976
    %1242 = vmatpush1.msra.mxu0 %v975
    %1243 = vmatprep.subr.mxu0 0.0
    %1244 = vmatpush1.msra.mxu0 0.0
    %1245 = vmatprep.subr.mxu0 0.0
    %1246 = vmatpush1.msra.mxu0 0.0
    %1247 = vmatprep.subr.mxu0 0.0
    %1248 = vmatpush1.msra.mxu0 0.0
    %1249 = vmatprep.subr.mxu0 0.0
    %1250 = vmatpush1.msra.mxu0 0.0
    %1251 = vmatprep.subr.mxu0 0.0
    %1252 = vmatpush1.msra.mxu0 0.0
    %1253 = vmatprep.subr.mxu0 0.0
    %1254 = vmatpush1.msra.mxu0 0.0
    %1255 = vmatprep.subr.mxu0 0.0
    %1256 = vmatpush1.msra.mxu0 0.0
    %1257 = vmatprep.subr.mxu0 0.0
    %1258 = vmatpush1.msra.mxu0 0.0
    %1259 = vmatprep.subr.mxu0 0.0
    %1260 = vmatpush1.msra.mxu0 0.0
    %1261 = vmatprep.subr.mxu0 0.0
    %1262 = vmatpush1.msra.mxu0 0.0
    %1263 = vmatprep.subr.mxu0 0.0
    %1264 = vmatpush1.msra.mxu0 0.0
    %1265 = vmatprep.subr.mxu0 0.0
    %1266 = vmatpush1.msra.mxu0 0.0
    %1267 = vmatprep.subr.mxu0 0.0
    %1268 = vmatpush1.msra.mxu0 0.0
    %1269 = vmatprep.subr.mxu0 0.0
    %1270 = vmatpush1.msra.mxu0 0.0
    %1271 = vmatprep.subr.mxu0 0.0
    %1272 = vmatpush1.msra.mxu0 0.0
    %1273 = vmatprep.subr.mxu0 0.0
    %1274 = vmatpush1.msra.mxu0 0.0
    %1275 = vmatprep.subr.mxu0 0.0
    %1276 = vmatpush1.msra.mxu0 0.0
    %1277 = vmatprep.subr.mxu0 0.0
    %1278 = vmatpush1.msra.mxu0 0.0
    %1279 = vmatprep.subr.mxu0 0.0
    %1280 = vmatpush1.msra.mxu0 0.0
    %1281 = vmatprep.subr.mxu0 0.0
    %1282 = vmatpush1.msra.mxu0 0.0
    %1283 = vmatprep.subr.mxu0 0.0
    %1284 = vmatpush1.msra.mxu0 0.0
    %1285 = vmatprep.subr.mxu0 0.0
    %1286 = vmatpush1.msra.mxu0 0.0
    %1287 = vmatprep.subr.mxu0 0.0
    %1288 = vmatpush1.msra.mxu0 0.0
    %1289 = vmatprep.subr.mxu0 0.0
    %1290 = vmatpush1.msra.mxu0 0.0
    %1291 = vmatprep.subr.mxu0 0.0
    %1292 = vmatpush1.msra.mxu0 0.0
    %1293 = vmatprep.subr.mxu0 0.0
    %1294 = vmatpush1.msra.mxu0 0.0
    %1295 = vmatprep.subr.mxu0 0.0
    %1296 = vmatpush1.msra.mxu0 0.0
    %1297 = vmatprep.subr.mxu0 0.0
    %1298 = vmatpush1.msra.mxu0 0.0
    %1299 = vmatprep.mubr.f32.mxu0 0.0
    %1300 = vmatmul.mubr.f32.gmra.mrb[0].mxu0 %v1020
    %v1301 = vpop.f32.mrb[0].mxu0
    %v1302 = vadd.f32 %v1006, %v1301
    %v1303 = vpop.f32.mrb[0].mxu0
    %v1304 = vadd.f32 %v1010, %v1303
    %1305 = vdwg.mxu0
    %v1306 = vxor.u32 %v1089, 2147483648
    %v1307 = vxor.u32 %v1091, 2147483648
    %v1308 = vxor.u32 %v1160, 2147483648
    %v1309 = vxor.u32 %v1162, 2147483648
    %v1310 = vxor.u32 %v1231, 2147483648
    %v1311 = vxor.u32 %v1233, 2147483648
    %v1312 = vxor.u32 %v1302, 2147483648
    %v1313 = vxor.u32 %v1304, 2147483648
    %v1314 = vmul.f32 %v1306, 1.442695
    %v1315 = vpow.pop %v1314
    %v1316 = vmul.f32 %v1307, 1.442695
    %v1317 = vpow.pop %v1316
    %v1318 = vmul.f32 %v1308, 1.442695
    %v1319 = vpow.pop %v1318
    %v1320 = vmul.f32 %v1309, 1.442695
    %v1321 = vpow.pop %v1320
    %v1322 = vmul.f32 %v1310, 1.442695
    %v1323 = vpow.pop %v1322
    %v1324 = vmul.f32 %v1311, 1.442695
    %v1325 = vpow.pop %v1324
    %v1326 = vmul.f32 %v1312, 1.442695
    %v1327 = vpow.pop %v1326
    %v1328 = vmul.f32 %v1313, 1.442695
    %v1329 = vpow.pop %v1328
    %v1330 = vadd.f32 %v1315, 1.0
    %v1331 = vadd.f32 %v1317, 1.0
    %v1332 = vadd.f32 %v1319, 1.0
    %v1333 = vadd.f32 %v1321, 1.0
    %v1334 = vadd.f32 %v1323, 1.0
    %v1335 = vadd.f32 %v1325, 1.0
    %v1336 = vadd.f32 %v1327, 1.0
    %v1337 = vadd.f32 %v1329, 1.0
    %v1338 = vrcp.pop %v1330
    %v1339 = vmul.f32 1.0, %v1338
    %v1340 = vrcp.pop %v1331
    %v1341 = vmul.f32 1.0, %v1340
    %v1342 = vrcp.pop %v1332
    %v1343 = vmul.f32 1.0, %v1342
    %v1344 = vrcp.pop %v1333
    %v1345 = vmul.f32 1.0, %v1344
    %v1346 = vrcp.pop %v1334
    %v1347 = vmul.f32 1.0, %v1346
    %v1348 = vrcp.pop %v1335
    %v1349 = vmul.f32 1.0, %v1348
    %v1350 = vrcp.pop %v1336
    %v1351 = vmul.f32 1.0, %v1350
    %v1352 = vrcp.pop %v1337
    %v1353 = vmul.f32 1.0, %v1352
    %v1362 = vcombine.low %v1339, %v1341
    %v1363 = vcombine.low %v1343, %v1345
    %v1365 = vunpack.c.l.s4 1983009808
    %v1366 = vunpack.c.0.s8 %v1365
    %v1367 = vlaneseq
    %v1368 = vshrl.u32 %v1367, 7
    %v1369 = vsub.s32 %v1366, %v1368
    %v1370 = vrot.slane %v1362, %v1369
    %v1372 = vunpack.c.l.s4 1983009808
    %v1373 = vunpack.c.0.s8 %v1372
    %v1374 = vlaneseq
    %v1375 = vshrl.u32 %v1374, 7
    %v1376 = vsub.s32 %v1373, %v1375
    %v1377 = vrot.slane %v1363, %v1376
    %v1378 = vcombine.low %v1370, %v1377
    %v1379 = vcombine.low %v1347, %v1349
    %v1380 = vcombine.low %v1351, %v1353
    %v1382 = vunpack.c.l.s4 1983009808
    %v1383 = vunpack.c.0.s8 %v1382
    %v1384 = vlaneseq
    %v1385 = vshrl.u32 %v1384, 7
    %v1386 = vsub.s32 %v1383, %v1385
    %v1387 = vrot.slane %v1379, %v1386
    %v1389 = vunpack.c.l.s4 1983009808
    %v1390 = vunpack.c.0.s8 %v1389
    %v1391 = vlaneseq
    %v1392 = vshrl.u32 %v1391, 7
    %v1393 = vsub.s32 %v1390, %v1392
    %v1394 = vrot.slane %v1380, %v1393
    %v1395 = vcombine.low %v1387, %v1394
    %1398 = vst [vmem:[#allocation2] sm:$0xff] %v1378
    %1399 = vst [vmem:[#allocation2 + $0x8] sm:$0xff] %v1395
    %vm1400 = vcmask 58368
    %1401 = vst.msk [vmem:[#allocation4] sm:$0x3] %vm1400, %v687
    %1402 = vst.msk [vmem:[#allocation6] sm:$0x3] %vm1400, %v768
    // Predicated region
    $region66: #{tpu_custom_call.1} parent=1 // pred_check
      _
    $region67: #{tpu_custom_call.1} parent=1 // pred_check_branch
      %1404 = sbr.rel (0) target = $region69
    $region68: #{tpu_custom_call.1} parent=1 // pred_region
      %s1406 = ssub.s32 256, 256
      %1407 = vsyncadd [#allocation3], %s1406
      %s1409 = sshll.u32 [#allocation2], 4
      %s1410 = int_to_ptr.vmem [resolvable:$true] %s1409
      %1412 = dma.vmem_to_hbm [thread:$0]  %s1410, 256, %s16, [#allocation3]
    $region69: #{tpu_custom_call.1} parent=1 // pred_fallthru
      _
    // Predicated region
    $region70: #{tpu_custom_call.1} parent=1 // pred_check
      _
    $region71: #{tpu_custom_call.1} parent=1 // pred_check_branch
      %1414 = sbr.rel (0) target = $region73
    $region72: #{tpu_custom_call.1} parent=1 // pred_region
      %s1416 = ssub.s32 32, 32
      %1417 = vsyncadd [#allocation5], %s1416
      %s1419 = sshll.u32 [#allocation4], 4
      %s1420 = int_to_ptr.vmem [resolvable:$true] %s1419
      %1422 = dma.vmem_to_hbm [thread:$0]  %s1420, 32, %s17, [#allocation5]
    $region73: #{tpu_custom_call.1} parent=1 // pred_fallthru
      _
    // Predicated region
    $region74: #{tpu_custom_call.1} parent=1 // pred_check
      _
    $region75: #{tpu_custom_call.1} parent=1 // pred_check_branch
      %1424 = sbr.rel (0) target = $region77
    $region76: #{tpu_custom_call.1} parent=1 // pred_region
      %s1426 = ssub.s32 32, 32
      %1427 = vsyncadd [#allocation5], %s1426
      %s1429 = sshll.u32 [#allocation6], 4
      %s1430 = int_to_ptr.vmem [resolvable:$true] %s1429
      %1432 = dma.vmem_to_hbm [thread:$0]  %s1430, 32, %s18, [#allocation5]
    $region77: #{tpu_custom_call.1} parent=1 // pred_fallthru
      _
    // Predicated region
    $region78: #{tpu_custom_call.1} parent=1 // pred_check
      _
    $region79: #{tpu_custom_call.1} parent=1 // pred_check_branch
      %1434 = sbr.rel (0) target = $region81
    $region80: #{tpu_custom_call.1} parent=1 // pred_region
      %1435 = dma.done [#allocation3], 256
    $region81: #{tpu_custom_call.1} parent=1 // pred_fallthru
      _
    // Predicated region
    $region82: #{tpu_custom_call.1} parent=1 // pred_check
      _
    $region83: #{tpu_custom_call.1} parent=1 // pred_check_branch
      %1437 = sbr.rel (0) target = $region85
    $region84: #{tpu_custom_call.1} parent=1 // pred_region
      %1438 = dma.done [#allocation5], 32
    $region85: #{tpu_custom_call.1} parent=1 // pred_fallthru
      _
    // Predicated region
    $region86: #{tpu_custom_call.1} parent=1 // pred_check
      _
    $region87: #{tpu_custom_call.1} parent=1 // pred_check_branch
      %1440 = sbr.rel (0) target = $region89
    $region88: #{tpu_custom_call.1} parent=1 // pred_region
      %1441 = dma.done [#allocation5], 32
    $region89: #{tpu_custom_call.1} parent=1 // pred_fallthru
      _
    %1442 = vsyncpa [#allocation3], 1
    %1443 = vsyncpa [#allocation5], 1

</llo_original>
